<compile_context>
chip_gen: v7x
topology: tpu7x:2x2x1
jax: 0.10.0
libtpu: 0.0.40
codegen_flags: <defaults>
</compile_context>

<pallas_src>
import functools
import math

import jax
import jax.numpy as jnp
from jax import lax
from jax.experimental import pallas as pl
from jax.experimental.pallas import tpu as pltpu


# Conservative scoped-VMEM budget: fits under v7x's 64 MiB physical VMEM with
# headroom, and is plenty for the double-buffered tiles chosen below.
_VMEM_LIMIT_BYTES = 48 * 1024 * 1024

# Tile caps (v7x-safe; v5e/v6e have more VMEM but these already pipeline well).
_TM_CAP = 256     # rows (sublane) per tile
_TN_CAP = 512     # output columns (lane) per tile
_TK_CAP = 512     # contraction per tile


def _pick_tile(dim, cap, gran):
    """Largest tile <= cap that divides dim and is a multiple of gran.

    If dim <= cap the whole dimension is used (full-dim blocks are always
    legal).  Falls back to the full dim if no aligned divisor exists.
    """
    if dim <= cap:
        return dim
    t = (cap // gran) * gran
    while t >= gran:
        if dim % t == 0:
            return t
        t -= gran
    return dim


# -------------------- fused matmul (+bias [+GELU] [+add+LN]) ----------------

def _matmul_fused_kernel(*refs, activation, fuse_ln, eps):
    if fuse_ln:
        x_ref, w_ref, b_ref, res_ref, g_ref, bt_ref, o_ref, acc_ref = refs
    else:
        x_ref, w_ref, b_ref, o_ref, acc_ref = refs
        res_ref = g_ref = bt_ref = None

    k = pl.program_id(2)

    @pl.when(k == 0)
    def _():
        acc_ref[...] = jnp.zeros_like(acc_ref)

    acc_ref[...] += jnp.dot(x_ref[...], w_ref[...],
                            preferred_element_type=jnp.float32)

    @pl.when(k == pl.num_programs(2) - 1)
    def _():
        y = acc_ref[...] + b_ref[...].astype(jnp.float32)
        if activation == "gelu":
            # tanh-approx GELU (BERT intermediate activation), f32 math -> EUP.
            y = 0.5 * y * (1.0 + jnp.tanh(
                0.7978845608028654 * (y + 0.044715 * y * y * y)))
        if fuse_ln:
            y = y + res_ref[...].astype(jnp.float32)
            mu = jnp.mean(y, axis=-1, keepdims=True)
            yc = y - mu
            var = jnp.mean(yc * yc, axis=-1, keepdims=True)
            inv = lax.rsqrt(var + eps)
            y = yc * inv * g_ref[...].astype(jnp.float32) \
                + bt_ref[...].astype(jnp.float32)
        o_ref[...] = y.astype(o_ref.dtype)


def matmul_fused(x, w, b, *, activation="none", residual=None,
                 ln_gamma=None, ln_beta=None, eps=1e-12, out_dtype=None):
    """y = x @ w + b, optionally followed by GELU and/or (y+residual)->LayerNorm.

    Tiled over (M, N, K) with an f32 VMEM accumulator.  When LayerNorm is
    fused, the full output width N lives in one tile so the row reduction is
    complete (N = hidden, which fits comfortably in VMEM).
    """
    M, K = x.shape
    _, N = w.shape
    fuse_ln = residual is not None
    if out_dtype is None:
        out_dtype = x.dtype

    tm = _pick_tile(M, _TM_CAP, 8)
    tk = _pick_tile(K, _TK_CAP, 128)
    tn = N if fuse_ln else _pick_tile(N, _TN_CAP, 128)
    grid = (M // tm, N // tn, K // tk)

    in_specs = [
        pl.BlockSpec((tm, tk), lambda i, j, kk: (i, kk)),
        pl.BlockSpec((tk, tn), lambda i, j, kk: (kk, j)),
        pl.BlockSpec((1, tn), lambda i, j, kk: (0, j)),
    ]
    args = [x, w, b.reshape(1, N)]
    if fuse_ln:
        in_specs += [
            pl.BlockSpec((tm, tn), lambda i, j, kk: (i, j)),
            pl.BlockSpec((1, tn), lambda i, j, kk: (0, j)),
            pl.BlockSpec((1, tn), lambda i, j, kk: (0, j)),
        ]
        args += [residual, ln_gamma.reshape(1, N), ln_beta.reshape(1, N)]

    itemsize = x.dtype.itemsize
    bytes_accessed = (M * K + K * N + M * N) * itemsize
    if fuse_ln:
        bytes_accessed += M * N * residual.dtype.itemsize
    cost = pl.CostEstimate(
        flops=2 * M * N * K,
        transcendentals=(M * N if activation == "gelu" else 0),
        bytes_accessed=bytes_accessed)

    return pl.pallas_call(
        functools.partial(_matmul_fused_kernel, activation=activation,
                          fuse_ln=fuse_ln, eps=eps),
        out_shape=jax.ShapeDtypeStruct((M, N), out_dtype),
        grid=grid,
        in_specs=in_specs,
        out_specs=pl.BlockSpec((tm, tn), lambda i, j, kk: (i, j)),
        scratch_shapes=[pltpu.VMEM((tm, tn), jnp.float32)],
        compiler_params=pltpu.CompilerParams(
            dimension_semantics=("parallel", "parallel", "arbitrary"),
            vmem_limit_bytes=_VMEM_LIMIT_BYTES),
        cost_estimate=cost,
    )(*args)


# ------------------------------- attention ----------------------------------

def _attention_kernel(qkv_ref, m_ref, o_ref, *, n_heads, head_dim, hidden,
                      scale):
    # qkv_ref: (S, 3H) bf16 for one batch element; m_ref: (1, 1, S) f32 mask.
    m = m_ref[0]                                   # (1, S) additive mask, f32
    ctxs = []
    for h in range(n_heads):                       # static unroll over heads
        q = qkv_ref[:, h * head_dim:(h + 1) * head_dim]
        k = qkv_ref[:, hidden + h * head_dim:hidden + (h + 1) * head_dim]
        v = qkv_ref[:, 2 * hidden + h * head_dim:2 * hidden + (h + 1) * head_dim]
        # Contract on the feature axis of both q and k (no in-kernel k.T).
        s = lax.dot_general(q, k, (((1,), (1,)), ((), ())),
                            preferred_element_type=jnp.float32) * scale
        s = s + m                                   # f32 mask add, pre-softmax
        s = s - jnp.max(s, axis=-1, keepdims=True)
        p = jnp.exp(s)
        denom = jnp.sum(p, axis=-1, keepdims=True)
        ctx = jnp.dot(p.astype(v.dtype), v, preferred_element_type=jnp.float32)
        ctxs.append(ctx * pl.reciprocal(denom, approx=True))
    # Single lane-dense (S, H) store; head merge is free (no transposes).
    o_ref[...] = jnp.concatenate(ctxs, axis=-1).astype(o_ref.dtype)


def attention(qkv, add_mask, *, batch, seq, n_heads, head_dim, hidden):
    # qkv: (B*S, 3H) bf16; add_mask: (B, 1, S) f32 additive (0 / -1e9).
    BS, _ = qkv.shape
    scale = 1.0 / math.sqrt(head_dim)
    bytes_accessed = (qkv.size * qkv.dtype.itemsize
                      + BS * hidden * qkv.dtype.itemsize
                      + add_mask.size * 4)
    cost = pl.CostEstimate(
        flops=4 * batch * n_heads * seq * seq * head_dim,
        transcendentals=batch * n_heads * seq * seq,
        bytes_accessed=bytes_accessed)
    return pl.pallas_call(
        functools.partial(_attention_kernel, n_heads=n_heads,
                          head_dim=head_dim, hidden=hidden, scale=scale),
        out_shape=jax.ShapeDtypeStruct((BS, hidden), qkv.dtype),
        grid=(batch,),
        in_specs=[pl.BlockSpec((seq, 3 * hidden), lambda b: (b, 0)),
                  pl.BlockSpec((1, 1, seq), lambda b: (b, 0, 0))],
        out_specs=pl.BlockSpec((seq, hidden), lambda b: (b, 0)),
        compiler_params=pltpu.CompilerParams(
            dimension_semantics=("parallel",),
            vmem_limit_bytes=_VMEM_LIMIT_BYTES),
        cost_estimate=cost,
    )(qkv, add_mask)


# -------------------------- standalone LayerNorm -----------------------------
# Only used for the embedding LayerNorm (no residual, no zeros tensor).

def _layernorm_kernel(x_ref, g_ref, b_ref, o_ref, *, eps):
    x = x_ref[...].astype(jnp.float32)
    mu = jnp.mean(x, axis=-1, keepdims=True)
    xc = x - mu
    var = jnp.mean(xc * xc, axis=-1, keepdims=True)
    inv = lax.rsqrt(var + eps)
    o_ref[...] = (xc * inv * g_ref[...] + b_ref[...]).astype(o_ref.dtype)


def layernorm(x, gamma, beta, *, eps=1e-12, out_dtype=jnp.bfloat16):
    M, H = x.shape
    tm = _pick_tile(M, _TM_CAP, 8)
    return pl.pallas_call(
        functools.partial(_layernorm_kernel, eps=eps),
        out_shape=jax.ShapeDtypeStruct((M, H), out_dtype),
        grid=(M // tm,),
        in_specs=[pl.BlockSpec((tm, H), lambda i: (i, 0)),
                  pl.BlockSpec((1, H), lambda i: (0, 0)),
                  pl.BlockSpec((1, H), lambda i: (0, 0))],
        out_specs=pl.BlockSpec((tm, H), lambda i: (i, 0)),
        compiler_params=pltpu.CompilerParams(
            dimension_semantics=("parallel",),
            vmem_limit_bytes=_VMEM_LIMIT_BYTES),
    )(x, gamma.reshape(1, H), beta.reshape(1, H))


# --------------------------- classifier head ---------------------------------

def _classifier_kernel(x_ref, w_ref, b_ref, o_ref):
    logits = jnp.dot(x_ref[...], w_ref[...], preferred_element_type=jnp.float32)
    logits = logits + b_ref[...].astype(jnp.float32)
    m = jnp.max(logits, axis=-1, keepdims=True)
    z = logits - m
    lse = jnp.log(jnp.sum(jnp.exp(z), axis=-1, keepdims=True))
    o_ref[...] = (z - lse).astype(o_ref.dtype)      # log_softmax over classes


def classify_logsoftmax(x, w, b):
    B, H = x.shape
    _, C = w.shape
    return pl.pallas_call(
        _classifier_kernel,
        out_shape=jax.ShapeDtypeStruct((B, C), jnp.float32),
        grid=(1,),
        in_specs=[pl.BlockSpec((B, H), lambda i: (0, 0)),
                  pl.BlockSpec((H, C), lambda i: (0, 0)),
                  pl.BlockSpec((1, C), lambda i: (0, 0))],
        out_specs=pl.BlockSpec((B, C), lambda i: (0, 0)),
        compiler_params=pltpu.CompilerParams(
            vmem_limit_bytes=_VMEM_LIMIT_BYTES),
    )(x, w, b.reshape(1, C))


# ----------------------------- model (glue) ----------------------------------

def init_params(key, cfg):
    H, I, V, S, C = (cfg["hidden"], cfg["intermediate"], cfg["vocab"],
                     cfg["seq"], cfg["n_class"])
    std = 0.02

    def nrm(k, shape, dtype=jnp.float32):
        return (std * jax.random.normal(k, shape, dtype=jnp.float32)).astype(dtype)

    keys = jax.random.split(key, 5 + cfg["n_layers"])
    params = {
        "word_emb": nrm(keys[0], (V, H)),
        "pos_emb": nrm(keys[1], (S, H)),
        "type_emb": nrm(keys[2], (2, H)),
        "emb_ln_g": jnp.ones((H,), jnp.float32),
        "emb_ln_b": jnp.zeros((H,), jnp.float32),
        "cls_w": nrm(keys[3], (H, C), jnp.bfloat16),
        "cls_b": jnp.zeros((C,), jnp.float32),
        "layers": [],
    }
    for l in range(cfg["n_layers"]):
        lk = jax.random.split(keys[5 + l], 4)
        params["layers"].append({
            # fused QKV projection: (H, 3H) bf16 weights, f32 bias
            "w_qkv": nrm(lk[0], (H, 3 * H), jnp.bfloat16),
            "b_qkv": jnp.zeros((3 * H,), jnp.float32),
            "wo": nrm(lk[1], (H, H), jnp.bfloat16),
            "bo": jnp.zeros((H,), jnp.float32),
            "ln1_g": jnp.ones((H,), jnp.float32),
            "ln1_b": jnp.zeros((H,), jnp.float32),
            "w1": nrm(lk[2], (H, I), jnp.bfloat16),
            "b1": jnp.zeros((I,), jnp.float32),
            "w2": nrm(lk[3], (I, H), jnp.bfloat16),
            "b2": jnp.zeros((H,), jnp.float32),
            "ln2_g": jnp.ones((H,), jnp.float32),
            "ln2_b": jnp.zeros((H,), jnp.float32),
        })
    return params


def bert_for_sequence_classification(params, input_ids, attention_mask, cfg):
    B, S = input_ids.shape
    H, nH, Dh = cfg["hidden"], cfg["n_heads"], cfg["head_dim"]

    # Embeddings (gather is glue), then embedding LayerNorm (no fake residual).
    # TODO(synk): segment / token_type ids are fixed to type 0 (the spec's
    # forward never passes token_type_ids).
    emb = (params["word_emb"][input_ids]
           + params["pos_emb"][None, :S, :]
           + params["type_emb"][0][None, None, :])
    x = layernorm(emb.reshape(B * S, H), params["emb_ln_g"],
                  params["emb_ln_b"])                       # (B*S, H) bf16

    # Additive attention mask kept in f32: 0 where attended, -1e9 where masked.
    add_mask = ((1.0 - attention_mask.astype(jnp.float32)) * -1e9).reshape(B, 1, S)

    for layer in params["layers"]:
        # --- self-attention block (3 pallas_calls) ---
        qkv = matmul_fused(x, layer["w_qkv"], layer["b_qkv"])      # (B*S, 3H)
        ctx = attention(qkv, add_mask, batch=B, seq=S,
                        n_heads=nH, head_dim=Dh, hidden=H)          # (B*S, H)
        x = matmul_fused(ctx, layer["wo"], layer["bo"],
                         residual=x, ln_gamma=layer["ln1_g"],
                         ln_beta=layer["ln1_b"])                    # add+LN fused

        # --- feed-forward block (2 pallas_calls) ---
        h = matmul_fused(x, layer["w1"], layer["b1"], activation="gelu")
        x = matmul_fused(h, layer["w2"], layer["b2"],
                         residual=x, ln_gamma=layer["ln2_g"],
                         ln_beta=layer["ln2_b"])                    # add+LN fused

    # CLS-token features: rows 0, S, 2S, ... of the flat token matrix
    # (cheap strided slice, no (B,S,H) reshape materialized).
    cls_feats = x[::S]                                              # (B, H)
    # nn.Dropout is identity at inference time.
    return classify_logsoftmax(cls_feats, params["cls_w"], params["cls_b"])


# ---------------------------------- main --------------------------------------

if __name__ == "__main__":
    cfg = dict(vocab=128, seq=8, hidden=64, n_heads=2, head_dim=32,
               intermediate=128, n_layers=2, n_class=4)

    root = jax.random.PRNGKey(0)
    k_param, k_ids = jax.random.split(root)
    params = init_params(k_param, cfg)

    B, S = 2, cfg["seq"]
    input_ids = jax.random.randint(k_ids, (B, S), 0, cfg["vocab"], dtype=jnp.int32)
    attention_mask = jnp.ones((B, S), dtype=jnp.int32).at[1, 6:].set(0)  # pad tail of ex. 1

    fwd = jax.jit(functools.partial(bert_for_sequence_classification, cfg=cfg))
    log_probs = fwd(params, input_ids, attention_mask)
    log_probs = jax.block_until_ready(log_probs)

    assert log_probs.shape == (B, cfg["n_class"])
    assert bool(jnp.all(jnp.isfinite(log_probs)))
    # rows of log_softmax must exp-sum to 1
    assert bool(jnp.allclose(jnp.exp(log_probs).sum(axis=1), 1.0, atol=1e-5))
    print("KERNEL_OK")
</pallas_src>

<mosaic_0001>
module attributes {stable_mosaic.version = 11 : i64} {
  func.func @_layernorm_kernel(%arg0: i32, %arg1: memref<16x64xf32, #tpu.memory_space<vmem>>, %arg2: memref<1x64xf32, #tpu.memory_space<vmem>>, %arg3: memref<1x64xf32, #tpu.memory_space<vmem>>, %arg4: memref<16x64xbf16, #tpu.memory_space<vmem>>) attributes {dimension_semantics = [#tpu.dimension_semantics<parallel>], iteration_bounds = array<i64: 1>, scalar_prefetch = 0 : i64, scratch_operands = 0 : i64, tpu.core_type = #tpu.core_type<tc>, window_params = [{transform_indices = @transform_0, window_bounds = array<i64: 16, 64>}, {pipeline_mode = #tpu.pipeline_mode<synchronous>, transform_indices = @transform_1, window_bounds = array<i64: 1, 64>}, {pipeline_mode = #tpu.pipeline_mode<synchronous>, transform_indices = @transform_2, window_bounds = array<i64: 1, 64>}, {transform_indices = @transform_3, window_bounds = array<i64: 16, 64>}]} {
    %c0 = arith.constant 0 : index
    %c0_0 = arith.constant 0 : index
    %0 = vector.load %arg1[%c0, %c0_0] : memref<16x64xf32, #tpu.memory_space<vmem>>, vector<16x64xf32>
    %cst = arith.constant dense<0.000000e+00> : vector<16xf32>
    %1 = vector.multi_reduction <add>, %0, %cst [1] : vector<16x64xf32> to vector<16xf32>
    %2 = vector.shape_cast %1 : vector<16xf32> to vector<16x1xf32>
    %cst_1 = arith.constant 6.400000e+01 : f32
    %3 = vector.broadcast %cst_1 : f32 to vector<16x1xf32>
    %4 = arith.divf %2, %3 : vector<16x1xf32>
    %5 = vector.broadcast %4 : vector<16x1xf32> to vector<16x64xf32>
    %6 = arith.subf %0, %5 : vector<16x64xf32>
    %7 = arith.mulf %6, %6 : vector<16x64xf32>
    %cst_2 = arith.constant dense<0.000000e+00> : vector<16xf32>
    %8 = vector.multi_reduction <add>, %7, %cst_2 [1] : vector<16x64xf32> to vector<16xf32>
    %9 = vector.shape_cast %8 : vector<16xf32> to vector<16x1xf32>
    %cst_3 = arith.constant 6.400000e+01 : f32
    %10 = vector.broadcast %cst_3 : f32 to vector<16x1xf32>
    %11 = arith.divf %9, %10 : vector<16x1xf32>
    %cst_4 = arith.constant 9.99999996E-13 : f32
    %12 = vector.broadcast %cst_4 : f32 to vector<16x1xf32>
    %13 = arith.addf %11, %12 : vector<16x1xf32>
    %14 = math.rsqrt %13 : vector<16x1xf32>
    %15 = vector.broadcast %14 : vector<16x1xf32> to vector<16x64xf32>
    %16 = arith.mulf %6, %15 : vector<16x64xf32>
    %c0_5 = arith.constant 0 : index
    %c0_6 = arith.constant 0 : index
    %17 = vector.load %arg2[%c0_5, %c0_6] : memref<1x64xf32, #tpu.memory_space<vmem>>, vector<1x64xf32>
    %18 = vector.broadcast %17 : vector<1x64xf32> to vector<16x64xf32>
    %19 = arith.mulf %16, %18 : vector<16x64xf32>
    %c0_7 = arith.constant 0 : index
    %c0_8 = arith.constant 0 : index
    %20 = vector.load %arg3[%c0_7, %c0_8] : memref<1x64xf32, #tpu.memory_space<vmem>>, vector<1x64xf32>
    %21 = vector.broadcast %20 : vector<1x64xf32> to vector<16x64xf32>
    %22 = arith.addf %19, %21 : vector<16x64xf32>
    %23 = arith.truncf %22 : vector<16x64xf32> to vector<16x64xbf16>
    %c0_9 = arith.constant 0 : index
    %c0_10 = arith.constant 0 : index
    %24 = vector.load %arg4[%c0_9, %c0_10] : memref<16x64xbf16, #tpu.memory_space<vmem>>, vector<16x64xbf16>
    tpu.vector_store %arg4[%c0_9, %c0_10], %23 {strides = array<i32>} : memref<16x64xbf16, #tpu.memory_space<vmem>>, vector<16x64xbf16>,
    return
  }
  func.func @transform_0(%arg0: i32) -> (i32, i32) {
    %c0_i32 = arith.constant 0 : i32
    %c0_i32_0 = arith.constant 0 : i32
    return %arg0, %c0_i32 : i32, i32
  }
  func.func @transform_1(%arg0: i32) -> (i32, i32) {
    %c0_i32 = arith.constant 0 : i32
    %c0_i32_0 = arith.constant 0 : i32
    %c0_i32_1 = arith.constant 0 : i32
    return %c0_i32, %c0_i32_0 : i32, i32
  }
  func.func @transform_2(%arg0: i32) -> (i32, i32) {
    %c0_i32 = arith.constant 0 : i32
    %c0_i32_0 = arith.constant 0 : i32
    %c0_i32_1 = arith.constant 0 : i32
    return %c0_i32, %c0_i32_0 : i32, i32
  }
  func.func @transform_3(%arg0: i32) -> (i32, i32) {
    %c0_i32 = arith.constant 0 : i32
    %c0_i32_0 = arith.constant 0 : i32
    return %arg0, %c0_i32 : i32, i32
  }
}

module attributes {stable_mosaic.version = 11 : i64} {
  func.func @_matmul_fused_kernel(%arg0: i32, %arg1: i32, %arg2: i32, %arg3: memref<16x64xbf16, #tpu.memory_space<vmem>>, %arg4: memref<64x192xbf16, #tpu.memory_space<vmem>>, %arg5: memref<1x192xf32, #tpu.memory_space<vmem>>, %arg6: memref<16x192xbf16, #tpu.memory_space<vmem>>, %arg7: memref<16x192xf32, #tpu.memory_space<vmem>>) attributes {dimension_semantics = [#tpu.dimension_semantics<parallel>, #tpu.dimension_semantics<parallel>, #tpu.dimension_semantics<arbitrary>], iteration_bounds = array<i64: 1, 1, 1>, scalar_prefetch = 0 : i64, scratch_operands = 1 : i64, tpu.core_type = #tpu.core_type<tc>, window_params = [{transform_indices = @transform_0, window_bounds = array<i64: 16, 64>}, {transform_indices = @transform_1, window_bounds = array<i64: 64, 192>}, {transform_indices = @transform_2, window_bounds = array<i64: 1, 192>}, {transform_indices = @transform_3, window_bounds = array<i64: 16, 192>}]} {
    %c0_i32 = arith.constant 0 : i32
    %0 = arith.cmpi eq, %arg2, %c0_i32 : i32
    %1 = arith.extui %0 : i1 to i32
    %c0_i32_0 = arith.constant 0 : i32
    %2 = arith.cmpi ne, %1, %c0_i32_0 : i32
    scf.if %2 {
      %cst_10 = arith.constant 0.000000e+00 : f32
      %12 = vector.broadcast %cst_10 : f32 to vector<16x192xf32>
      %c0_11 = arith.constant 0 : index
      %c0_12 = arith.constant 0 : index
      %13 = vector.load %arg7[%c0_11, %c0_12] : memref<16x192xf32, #tpu.memory_space<vmem>>, vector<16x192xf32>
      tpu.vector_store %arg7[%c0_11, %c0_12], %12 {strides = array<i32>} : memref<16x192xf32, #tpu.memory_space<vmem>>, vector<16x192xf32>,
    } else {
    }
    %c0 = arith.constant 0 : index
    %c0_1 = arith.constant 0 : index
    %3 = vector.load %arg7[%c0, %c0_1] : memref<16x192xf32, #tpu.memory_space<vmem>>, vector<16x192xf32>
    %c0_2 = arith.constant 0 : index
    %c0_3 = arith.constant 0 : index
    %4 = vector.load %arg3[%c0_2, %c0_3] : memref<16x64xbf16, #tpu.memory_space<vmem>>, vector<16x64xbf16>
    %c0_4 = arith.constant 0 : index
    %c0_5 = arith.constant 0 : index
    %5 = vector.load %arg4[%c0_4, %c0_5] : memref<64x192xbf16, #tpu.memory_space<vmem>>, vector<64x192xbf16>
    %cst = arith.constant dense<0.000000e+00> : vector<16x192xf32>
    %6 = tpu.matmul %4, %5, %cst {dimension_numbers = #tpu.dot_dimension_numbers<[1], [0], [0], [1], [0, 0, 1, 1], [], []>} : vector<16x64xbf16>, vector<64x192xbf16>, vector<16x192xf32> -> vector<16x192xf32>
    %7 = arith.addf %3, %6 : vector<16x192xf32>
    %c0_6 = arith.constant 0 : index
    %c0_7 = arith.constant 0 : index
    %8 = vector.load %arg7[%c0_6, %c0_7] : memref<16x192xf32, #tpu.memory_space<vmem>>, vector<16x192xf32>
    tpu.vector_store %arg7[%c0_6, %c0_7], %7 {strides = array<i32>} : memref<16x192xf32, #tpu.memory_space<vmem>>, vector<16x192xf32>,
    %c0_i32_8 = arith.constant 0 : i32
    %9 = arith.cmpi eq, %arg2, %c0_i32_8 : i32
    %10 = arith.extui %9 : i1 to i32
    %c0_i32_9 = arith.constant 0 : i32
    %11 = arith.cmpi ne, %10, %c0_i32_9 : i32
    scf.if %11 {
      %c0_10 = arith.constant 0 : index
      %c0_11 = arith.constant 0 : index
      %12 = vector.load %arg7[%c0_10, %c0_11] : memref<16x192xf32, #tpu.memory_space<vmem>>, vector<16x192xf32>
      %c0_12 = arith.constant 0 : index
      %c0_13 = arith.constant 0 : index
      %13 = vector.load %arg5[%c0_12, %c0_13] : memref<1x192xf32, #tpu.memory_space<vmem>>, vector<1x192xf32>
      %14 = vector.broadcast %13 : vector<1x192xf32> to vector<16x192xf32>
      %15 = arith.addf %12, %14 : vector<16x192xf32>
      %16 = arith.truncf %15 : vector<16x192xf32> to vector<16x192xbf16>
      %c0_14 = arith.constant 0 : index
      %c0_15 = arith.constant 0 : index
      %17 = vector.load %arg6[%c0_14, %c0_15] : memref<16x192xbf16, #tpu.memory_space<vmem>>, vector<16x192xbf16>
      tpu.vector_store %arg6[%c0_14, %c0_15], %16 {strides = array<i32>} : memref<16x192xbf16, #tpu.memory_space<vmem>>, vector<16x192xbf16>,
    } else {
    }
    return
  }
  func.func @transform_0(%arg0: i32, %arg1: i32, %arg2: i32) -> (i32, i32) {
    %c0_i32 = arith.constant 0 : i32
    return %arg0, %arg2 : i32, i32
  }
  func.func @transform_1(%arg0: i32, %arg1: i32, %arg2: i32) -> (i32, i32) {
    %c0_i32 = arith.constant 0 : i32
    return %arg2, %arg1 : i32, i32
  }
  func.func @transform_2(%arg0: i32, %arg1: i32, %arg2: i32) -> (i32, i32) {
    %c0_i32 = arith.constant 0 : i32
    %c0_i32_0 = arith.constant 0 : i32
    return %c0_i32, %arg1 : i32, i32
  }
  func.func @transform_3(%arg0: i32, %arg1: i32, %arg2: i32) -> (i32, i32) {
    %c0_i32 = arith.constant 0 : i32
    return %arg0, %arg1 : i32, i32
  }
}

module attributes {stable_mosaic.version = 11 : i64} {
  func.func @_attention_kernel(%arg0: i32, %arg1: memref<8x192xbf16, #tpu.memory_space<vmem>>, %arg2: memref<1x1x8xf32, #tpu.memory_space<vmem>>, %arg3: memref<8x64xbf16, #tpu.memory_space<vmem>>) attributes {dimension_semantics = [#tpu.dimension_semantics<parallel>], iteration_bounds = array<i64: 2>, scalar_prefetch = 0 : i64, scratch_operands = 0 : i64, tpu.core_type = #tpu.core_type<tc>, window_params = [{transform_indices = @transform_0, window_bounds = array<i64: 8, 192>}, {transform_indices = @transform_1, window_bounds = array<i64: 1, 1, 8>}, {transform_indices = @transform_2, window_bounds = array<i64: 8, 64>}]} {
    %c0 = arith.constant 0 : index
    %c0_0 = arith.constant 0 : index
    %c0_1 = arith.constant 0 : index
    %0 = vector.load %arg2[%c0, %c0_0, %c0_1] : memref<1x1x8xf32, #tpu.memory_space<vmem>>, vector<1x1x8xf32>
    %1 = vector.shape_cast %0 : vector<1x1x8xf32> to vector<1x8xf32>
    %c0_2 = arith.constant 0 : index
    %c0_3 = arith.constant 0 : index
    %2 = vector.load %arg1[%c0_2, %c0_3] : memref<8x192xbf16, #tpu.memory_space<vmem>>, vector<8x32xbf16>
    %c0_4 = arith.constant 0 : index
    %c64 = arith.constant 64 : index
    %3 = vector.load %arg1[%c0_4, %c64] : memref<8x192xbf16, #tpu.memory_space<vmem>>, vector<8x32xbf16>
    %c0_5 = arith.constant 0 : index
    %c128 = arith.constant 128 : index
    %4 = vector.load %arg1[%c0_5, %c128] : memref<8x192xbf16, #tpu.memory_space<vmem>>, vector<8x32xbf16>
    %cst = arith.constant dense<0.000000e+00> : vector<8x8xf32>
    %5 = tpu.matmul %2, %3, %cst {dimension_numbers = #tpu.dot_dimension_numbers<[1], [1], [0], [0], [0, 0, 1, 0], [], []>} : vector<8x32xbf16>, vector<8x32xbf16>, vector<8x8xf32> -> vector<8x8xf32>
    %cst_6 = arith.constant 0.176776692 : f32
    %6 = vector.broadcast %cst_6 : f32 to vector<8x8xf32>
    %7 = arith.mulf %5, %6 : vector<8x8xf32>
    %8 = vector.broadcast %1 : vector<1x8xf32> to vector<8x8xf32>
    %9 = arith.addf %7, %8 : vector<8x8xf32>
    %cst_7 = arith.constant dense<0xFF800000> : vector<8xf32>
    %10 = vector.multi_reduction <maximumf>, %9, %cst_7 [1] : vector<8x8xf32> to vector<8xf32>
    %11 = vector.shape_cast %10 : vector<8xf32> to vector<8x1xf32>
    %12 = vector.broadcast %11 : vector<8x1xf32> to vector<8x8xf32>
    %13 = arith.subf %9, %12 : vector<8x8xf32>
    %14 = math.exp %13 : vector<8x8xf32>
    %cst_8 = arith.constant dense<0.000000e+00> : vector<8xf32>
    %15 = vector.multi_reduction <add>, %14, %cst_8 [1] : vector<8x8xf32> to vector<8xf32>
    %16 = vector.shape_cast %15 : vector<8xf32> to vector<8x1xf32>
    %17 = arith.truncf %14 : vector<8x8xf32> to vector<8x8xbf16>
    %cst_9 = arith.constant dense<0.000000e+00> : vector<8x32xf32>
    %18 = tpu.matmul %17, %4, %cst_9 {dimension_numbers = #tpu.dot_dimension_numbers<[1], [0], [0], [1], [0, 0, 1, 1], [], []>} : vector<8x8xbf16>, vector<8x32xbf16>, vector<8x32xf32> -> vector<8x32xf32>
    %19 = tpu.reciprocal %16 {approx = true} : vector<8x1xf32> -> vector<8x1xf32>
    %20 = vector.broadcast %19 : vector<8x1xf32> to vector<8x32xf32>
    %21 = arith.mulf %18, %20 : vector<8x32xf32>
    %c0_10 = arith.constant 0 : index
    %c32 = arith.constant 32 : index
    %22 = vector.load %arg1[%c0_10, %c32] : memref<8x192xbf16, #tpu.memory_space<vmem>>, vector<8x32xbf16>
    %c0_11 = arith.constant 0 : index
    %c96 = arith.constant 96 : index
    %23 = vector.load %arg1[%c0_11, %c96] : memref<8x192xbf16, #tpu.memory_space<vmem>>, vector<8x32xbf16>
    %c0_12 = arith.constant 0 : index
    %c160 = arith.constant 160 : index
    %24 = vector.load %arg1[%c0_12, %c160] : memref<8x192xbf16, #tpu.memory_space<vmem>>, vector<8x32xbf16>
    %cst_13 = arith.constant dense<0.000000e+00> : vector<8x8xf32>
    %25 = tpu.matmul %22, %23, %cst_13 {dimension_numbers = #tpu.dot_dimension_numbers<[1], [1], [0], [0], [0, 0, 1, 0], [], []>} : vector<8x32xbf16>, vector<8x32xbf16>, vector<8x8xf32> -> vector<8x8xf32>
    %cst_14 = arith.constant 0.176776692 : f32
    %26 = vector.broadcast %cst_14 : f32 to vector<8x8xf32>
    %27 = arith.mulf %25, %26 : vector<8x8xf32>
    %28 = vector.broadcast %1 : vector<1x8xf32> to vector<8x8xf32>
    %29 = arith.addf %27, %28 : vector<8x8xf32>
    %cst_15 = arith.constant dense<0xFF800000> : vector<8xf32>
    %30 = vector.multi_reduction <maximumf>, %29, %cst_15 [1] : vector<8x8xf32> to vector<8xf32>
    %31 = vector.shape_cast %30 : vector<8xf32> to vector<8x1xf32>
    %32 = vector.broadcast %31 : vector<8x1xf32> to vector<8x8xf32>
    %33 = arith.subf %29, %32 : vector<8x8xf32>
    %34 = math.exp %33 : vector<8x8xf32>
    %cst_16 = arith.constant dense<0.000000e+00> : vector<8xf32>
    %35 = vector.multi_reduction <add>, %34, %cst_16 [1] : vector<8x8xf32> to vector<8xf32>
    %36 = vector.shape_cast %35 : vector<8xf32> to vector<8x1xf32>
    %37 = arith.truncf %34 : vector<8x8xf32> to vector<8x8xbf16>
    %cst_17 = arith.constant dense<0.000000e+00> : vector<8x32xf32>
    %38 = tpu.matmul %37, %24, %cst_17 {dimension_numbers = #tpu.dot_dimension_numbers<[1], [0], [0], [1], [0, 0, 1, 1], [], []>} : vector<8x8xbf16>, vector<8x32xbf16>, vector<8x32xf32> -> vector<8x32xf32>
    %39 = tpu.reciprocal %36 {approx = true} : vector<8x1xf32> -> vector<8x1xf32>
    %40 = vector.broadcast %39 : vector<8x1xf32> to vector<8x32xf32>
    %41 = arith.mulf %38, %40 : vector<8x32xf32>
    %42 = tpu.concatenate %21, %41 in 1 : vector<8x32xf32>, vector<8x32xf32> -> vector<8x64xf32>
    %43 = arith.truncf %42 : vector<8x64xf32> to vector<8x64xbf16>
    %c0_18 = arith.constant 0 : index
    %c0_19 = arith.constant 0 : index
    %44 = vector.load %arg3[%c0_18, %c0_19] : memref<8x64xbf16, #tpu.memory_space<vmem>>, vector<8x64xbf16>
    tpu.vector_store %arg3[%c0_18, %c0_19], %43 {strides = array<i32>} : memref<8x64xbf16, #tpu.memory_space<vmem>>, vector<8x64xbf16>,
    return
  }
  func.func @transform_0(%arg0: i32) -> (i32, i32) {
    %c0_i32 = arith.constant 0 : i32
    %c0_i32_0 = arith.constant 0 : i32
    return %arg0, %c0_i32 : i32, i32
  }
  func.func @transform_1(%arg0: i32) -> (i32, i32, i32) {
    %c0_i32 = arith.constant 0 : i32
    %c0_i32_0 = arith.constant 0 : i32
    %c0_i32_1 = arith.constant 0 : i32
    return %arg0, %c0_i32, %c0_i32_0 : i32, i32, i32
  }
  func.func @transform_2(%arg0: i32) -> (i32, i32) {
    %c0_i32 = arith.constant 0 : i32
    %c0_i32_0 = arith.constant 0 : i32
    return %arg0, %c0_i32 : i32, i32
  }
}

module attributes {stable_mosaic.version = 11 : i64} {
  func.func @_matmul_fused_kernel(%arg0: i32, %arg1: i32, %arg2: i32, %arg3: memref<16x64xbf16, #tpu.memory_space<vmem>>, %arg4: memref<64x64xbf16, #tpu.memory_space<vmem>>, %arg5: memref<1x64xf32, #tpu.memory_space<vmem>>, %arg6: memref<16x64xbf16, #tpu.memory_space<vmem>>, %arg7: memref<1x64xf32, #tpu.memory_space<vmem>>, %arg8: memref<1x64xf32, #tpu.memory_space<vmem>>, %arg9: memref<16x64xbf16, #tpu.memory_space<vmem>>, %arg10: memref<16x64xf32, #tpu.memory_space<vmem>>) attributes {dimension_semantics = [#tpu.dimension_semantics<parallel>, #tpu.dimension_semantics<parallel>, #tpu.dimension_semantics<arbitrary>], iteration_bounds = array<i64: 1, 1, 1>, scalar_prefetch = 0 : i64, scratch_operands = 1 : i64, tpu.core_type = #tpu.core_type<tc>, window_params = [{transform_indices = @transform_0, window_bounds = array<i64: 16, 64>}, {transform_indices = @transform_1, window_bounds = array<i64: 64, 64>}, {transform_indices = @transform_2, window_bounds = array<i64: 1, 64>}, {transform_indices = @transform_3, window_bounds = array<i64: 16, 64>}, {transform_indices = @transform_4, window_bounds = array<i64: 1, 64>}, {transform_indices = @transform_5, window_bounds = array<i64: 1, 64>}, {transform_indices = @transform_6, window_bounds = array<i64: 16, 64>}]} {
    %c0_i32 = arith.constant 0 : i32
    %0 = arith.cmpi eq, %arg2, %c0_i32 : i32
    %1 = arith.extui %0 : i1 to i32
    %c0_i32_0 = arith.constant 0 : i32
    %2 = arith.cmpi ne, %1, %c0_i32_0 : i32
    scf.if %2 {
      %cst_10 = arith.constant 0.000000e+00 : f32
      %12 = vector.broadcast %cst_10 : f32 to vector<16x64xf32>
      %c0_11 = arith.constant 0 : index
      %c0_12 = arith.constant 0 : index
      %13 = vector.load %arg10[%c0_11, %c0_12] : memref<16x64xf32, #tpu.memory_space<vmem>>, vector<16x64xf32>
      tpu.vector_store %arg10[%c0_11, %c0_12], %12 {strides = array<i32>} : memref<16x64xf32, #tpu.memory_space<vmem>>, vector<16x64xf32>,
    } else {
    }
    %c0 = arith.constant 0 : index
    %c0_1 = arith.constant 0 : index
    %3 = vector.load %arg10[%c0, %c0_1] : memref<16x64xf32, #tpu.memory_space<vmem>>, vector<16x64xf32>
    %c0_2 = arith.constant 0 : index
    %c0_3 = arith.constant 0 : index
    %4 = vector.load %arg3[%c0_2, %c0_3] : memref<16x64xbf16, #tpu.memory_space<vmem>>, vector<16x64xbf16>
    %c0_4 = arith.constant 0 : index
    %c0_5 = arith.constant 0 : index
    %5 = vector.load %arg4[%c0_4, %c0_5] : memref<64x64xbf16, #tpu.memory_space<vmem>>, vector<64x64xbf16>
    %cst = arith.constant dense<0.000000e+00> : vector<16x64xf32>
    %6 = tpu.matmul %4, %5, %cst {dimension_numbers = #tpu.dot_dimension_numbers<[1], [0], [0], [1], [0, 0, 1, 1], [], []>} : vector<16x64xbf16>, vector<64x64xbf16>, vector<16x64xf32> -> vector<16x64xf32>
    %7 = arith.addf %3, %6 : vector<16x64xf32>
    %c0_6 = arith.constant 0 : index
    %c0_7 = arith.constant 0 : index
    %8 = vector.load %arg10[%c0_6, %c0_7] : memref<16x64xf32, #tpu.memory_space<vmem>>, vector<16x64xf32>
    tpu.vector_store %arg10[%c0_6, %c0_7], %7 {strides = array<i32>} : memref<16x64xf32, #tpu.memory_space<vmem>>, vector<16x64xf32>,
    %c0_i32_8 = arith.constant 0 : i32
    %9 = arith.cmpi eq, %arg2, %c0_i32_8 : i32
    %10 = arith.extui %9 : i1 to i32
    %c0_i32_9 = arith.constant 0 : i32
    %11 = arith.cmpi ne, %10, %c0_i32_9 : i32
    scf.if %11 {
      %c0_10 = arith.constant 0 : index
      %c0_11 = arith.constant 0 : index
      %12 = vector.load %arg10[%c0_10, %c0_11] : memref<16x64xf32, #tpu.memory_space<vmem>>, vector<16x64xf32>
      %c0_12 = arith.constant 0 : index
      %c0_13 = arith.constant 0 : index
      %13 = vector.load %arg5[%c0_12, %c0_13] : memref<1x64xf32, #tpu.memory_space<vmem>>, vector<1x64xf32>
      %14 = vector.broadcast %13 : vector<1x64xf32> to vector<16x64xf32>
      %15 = arith.addf %12, %14 : vector<16x64xf32>
      %c0_14 = arith.constant 0 : index
      %c0_15 = arith.constant 0 : index
      %16 = vector.load %arg6[%c0_14, %c0_15] : memref<16x64xbf16, #tpu.memory_space<vmem>>, vector<16x64xbf16>
      %17 = arith.extf %16 : vector<16x64xbf16> to vector<16x64xf32>
      %18 = arith.addf %15, %17 : vector<16x64xf32>
      %cst_16 = arith.constant dense<0.000000e+00> : vector<16xf32>
      %19 = vector.multi_reduction <add>, %18, %cst_16 [1] : vector<16x64xf32> to vector<16xf32>
      %20 = vector.shape_cast %19 : vector<16xf32> to vector<16x1xf32>
      %cst_17 = arith.constant 6.400000e+01 : f32
      %21 = vector.broadcast %cst_17 : f32 to vector<16x1xf32>
      %22 = arith.divf %20, %21 : vector<16x1xf32>
      %23 = vector.broadcast %22 : vector<16x1xf32> to vector<16x64xf32>
      %24 = arith.subf %18, %23 : vector<16x64xf32>
      %25 = arith.mulf %24, %24 : vector<16x64xf32>
      %cst_18 = arith.constant dense<0.000000e+00> : vector<16xf32>
      %26 = vector.multi_reduction <add>, %25, %cst_18 [1] : vector<16x64xf32> to vector<16xf32>
      %27 = vector.shape_cast %26 : vector<16xf32> to vector<16x1xf32>
      %cst_19 = arith.constant 6.400000e+01 : f32
      %28 = vector.broadcast %cst_19 : f32 to vector<16x1xf32>
      %29 = arith.divf %27, %28 : vector<16x1xf32>
      %cst_20 = arith.constant 9.99999996E-13 : f32
      %30 = vector.broadcast %cst_20 : f32 to vector<16x1xf32>
      %31 = arith.addf %29, %30 : vector<16x1xf32>
      %32 = math.rsqrt %31 : vector<16x1xf32>
      %33 = vector.broadcast %32 : vector<16x1xf32> to vector<16x64xf32>
      %34 = arith.mulf %24, %33 : vector<16x64xf32>
      %c0_21 = arith.constant 0 : index
      %c0_22 = arith.constant 0 : index
      %35 = vector.load %arg7[%c0_21, %c0_22] : memref<1x64xf32, #tpu.memory_space<vmem>>, vector<1x64xf32>
      %36 = vector.broadcast %35 : vector<1x64xf32> to vector<16x64xf32>
      %37 = arith.mulf %34, %36 : vector<16x64xf32>
      %c0_23 = arith.constant 0 : index
      %c0_24 = arith.constant 0 : index
      %38 = vector.load %arg8[%c0_23, %c0_24] : memref<1x64xf32, #tpu.memory_space<vmem>>, vector<1x64xf32>
      %39 = vector.broadcast %38 : vector<1x64xf32> to vector<16x64xf32>
      %40 = arith.addf %37, %39 : vector<16x64xf32>
      %41 = arith.truncf %40 : vector<16x64xf32> to vector<16x64xbf16>
      %c0_25 = arith.constant 0 : index
      %c0_26 = arith.constant 0 : index
      %42 = vector.load %arg9[%c0_25, %c0_26] : memref<16x64xbf16, #tpu.memory_space<vmem>>, vector<16x64xbf16>
      tpu.vector_store %arg9[%c0_25, %c0_26], %41 {strides = array<i32>} : memref<16x64xbf16, #tpu.memory_space<vmem>>, vector<16x64xbf16>,
    } else {
    }
    return
  }
  func.func @transform_0(%arg0: i32, %arg1: i32, %arg2: i32) -> (i32, i32) {
    %c0_i32 = arith.constant 0 : i32
    return %arg0, %arg2 : i32, i32
  }
  func.func @transform_1(%arg0: i32, %arg1: i32, %arg2: i32) -> (i32, i32) {
    %c0_i32 = arith.constant 0 : i32
    return %arg2, %arg1 : i32, i32
  }
  func.func @transform_2(%arg0: i32, %arg1: i32, %arg2: i32) -> (i32, i32) {
    %c0_i32 = arith.constant 0 : i32
    %c0_i32_0 = arith.constant 0 : i32
    return %c0_i32, %arg1 : i32, i32
  }
  func.func @transform_3(%arg0: i32, %arg1: i32, %arg2: i32) -> (i32, i32) {
    %c0_i32 = arith.constant 0 : i32
    return %arg0, %arg1 : i32, i32
  }
  func.func @transform_4(%arg0: i32, %arg1: i32, %arg2: i32) -> (i32, i32) {
    %c0_i32 = arith.constant 0 : i32
    %c0_i32_0 = arith.constant 0 : i32
    return %c0_i32, %arg1 : i32, i32
  }
  func.func @transform_5(%arg0: i32, %arg1: i32, %arg2: i32) -> (i32, i32) {
    %c0_i32 = arith.constant 0 : i32
    %c0_i32_0 = arith.constant 0 : i32
    return %c0_i32, %arg1 : i32, i32
  }
  func.func @transform_6(%arg0: i32, %arg1: i32, %arg2: i32) -> (i32, i32) {
    %c0_i32 = arith.constant 0 : i32
    return %arg0, %arg1 : i32, i32
  }
}

module attributes {stable_mosaic.version = 11 : i64} {
  func.func @_matmul_fused_kernel(%arg0: i32, %arg1: i32, %arg2: i32, %arg3: memref<16x64xbf16, #tpu.memory_space<vmem>>, %arg4: memref<64x128xbf16, #tpu.memory_space<vmem>>, %arg5: memref<1x128xf32, #tpu.memory_space<vmem>>, %arg6: memref<16x128xbf16, #tpu.memory_space<vmem>>, %arg7: memref<16x128xf32, #tpu.memory_space<vmem>>) attributes {dimension_semantics = [#tpu.dimension_semantics<parallel>, #tpu.dimension_semantics<parallel>, #tpu.dimension_semantics<arbitrary>], iteration_bounds = array<i64: 1, 1, 1>, scalar_prefetch = 0 : i64, scratch_operands = 1 : i64, tpu.core_type = #tpu.core_type<tc>, window_params = [{transform_indices = @transform_0, window_bounds = array<i64: 16, 64>}, {transform_indices = @transform_1, window_bounds = array<i64: 64, 128>}, {transform_indices = @transform_2, window_bounds = array<i64: 1, 128>}, {transform_indices = @transform_3, window_bounds = array<i64: 16, 128>}]} {
    %c0_i32 = arith.constant 0 : i32
    %0 = arith.cmpi eq, %arg2, %c0_i32 : i32
    %1 = arith.extui %0 : i1 to i32
    %c0_i32_0 = arith.constant 0 : i32
    %2 = arith.cmpi ne, %1, %c0_i32_0 : i32
    scf.if %2 {
      %cst_10 = arith.constant 0.000000e+00 : f32
      %12 = vector.broadcast %cst_10 : f32 to vector<16x128xf32>
      %c0_11 = arith.constant 0 : index
      %c0_12 = arith.constant 0 : index
      %13 = vector.load %arg7[%c0_11, %c0_12] : memref<16x128xf32, #tpu.memory_space<vmem>>, vector<16x128xf32>
      tpu.vector_store %arg7[%c0_11, %c0_12], %12 {strides = array<i32>} : memref<16x128xf32, #tpu.memory_space<vmem>>, vector<16x128xf32>,
    } else {
    }
    %c0 = arith.constant 0 : index
    %c0_1 = arith.constant 0 : index
    %3 = vector.load %arg7[%c0, %c0_1] : memref<16x128xf32, #tpu.memory_space<vmem>>, vector<16x128xf32>
    %c0_2 = arith.constant 0 : index
    %c0_3 = arith.constant 0 : index
    %4 = vector.load %arg3[%c0_2, %c0_3] : memref<16x64xbf16, #tpu.memory_space<vmem>>, vector<16x64xbf16>
    %c0_4 = arith.constant 0 : index
    %c0_5 = arith.constant 0 : index
    %5 = vector.load %arg4[%c0_4, %c0_5] : memref<64x128xbf16, #tpu.memory_space<vmem>>, vector<64x128xbf16>
    %cst = arith.constant dense<0.000000e+00> : vector<16x128xf32>
    %6 = tpu.matmul %4, %5, %cst {dimension_numbers = #tpu.dot_dimension_numbers<[1], [0], [0], [1], [0, 0, 1, 1], [], []>} : vector<16x64xbf16>, vector<64x128xbf16>, vector<16x128xf32> -> vector<16x128xf32>
    %7 = arith.addf %3, %6 : vector<16x128xf32>
    %c0_6 = arith.constant 0 : index
    %c0_7 = arith.constant 0 : index
    %8 = vector.load %arg7[%c0_6, %c0_7] : memref<16x128xf32, #tpu.memory_space<vmem>>, vector<16x128xf32>
    tpu.vector_store %arg7[%c0_6, %c0_7], %7 {strides = array<i32>} : memref<16x128xf32, #tpu.memory_space<vmem>>, vector<16x128xf32>,
    %c0_i32_8 = arith.constant 0 : i32
    %9 = arith.cmpi eq, %arg2, %c0_i32_8 : i32
    %10 = arith.extui %9 : i1 to i32
    %c0_i32_9 = arith.constant 0 : i32
    %11 = arith.cmpi ne, %10, %c0_i32_9 : i32
    scf.if %11 {
      %c0_10 = arith.constant 0 : index
      %c0_11 = arith.constant 0 : index
      %12 = vector.load %arg7[%c0_10, %c0_11] : memref<16x128xf32, #tpu.memory_space<vmem>>, vector<16x128xf32>
      %c0_12 = arith.constant 0 : index
      %c0_13 = arith.constant 0 : index
      %13 = vector.load %arg5[%c0_12, %c0_13] : memref<1x128xf32, #tpu.memory_space<vmem>>, vector<1x128xf32>
      %14 = vector.broadcast %13 : vector<1x128xf32> to vector<16x128xf32>
      %15 = arith.addf %12, %14 : vector<16x128xf32>
      %cst_14 = arith.constant 5.000000e-01 : f32
      %16 = vector.broadcast %cst_14 : f32 to vector<16x128xf32>
      %17 = arith.mulf %16, %15 : vector<16x128xf32>
      %cst_15 = arith.constant 4.471500e-02 : f32
      %18 = vector.broadcast %cst_15 : f32 to vector<16x128xf32>
      %19 = arith.mulf %18, %15 : vector<16x128xf32>
      %20 = arith.mulf %19, %15 : vector<16x128xf32>
      %21 = arith.mulf %20, %15 : vector<16x128xf32>
      %22 = arith.addf %15, %21 : vector<16x128xf32>
      %cst_16 = arith.constant 0.797884583 : f32
      %23 = vector.broadcast %cst_16 : f32 to vector<16x128xf32>
      %24 = arith.mulf %23, %22 : vector<16x128xf32>
      %25 = math.tanh %24 : vector<16x128xf32>
      %cst_17 = arith.constant 1.000000e+00 : f32
      %26 = vector.broadcast %cst_17 : f32 to vector<16x128xf32>
      %27 = arith.addf %26, %25 : vector<16x128xf32>
      %28 = arith.mulf %17, %27 : vector<16x128xf32>
      %29 = arith.truncf %28 : vector<16x128xf32> to vector<16x128xbf16>
      %c0_18 = arith.constant 0 : index
      %c0_19 = arith.constant 0 : index
      %30 = vector.load %arg6[%c0_18, %c0_19] : memref<16x128xbf16, #tpu.memory_space<vmem>>, vector<16x128xbf16>
      tpu.vector_store %arg6[%c0_18, %c0_19], %29 {strides = array<i32>} : memref<16x128xbf16, #tpu.memory_space<vmem>>, vector<16x128xbf16>,
    } else {
    }
    return
  }
  func.func @transform_0(%arg0: i32, %arg1: i32, %arg2: i32) -> (i32, i32) {
    %c0_i32 = arith.constant 0 : i32
    return %arg0, %arg2 : i32, i32
  }
  func.func @transform_1(%arg0: i32, %arg1: i32, %arg2: i32) -> (i32, i32) {
    %c0_i32 = arith.constant 0 : i32
    return %arg2, %arg1 : i32, i32
  }
  func.func @transform_2(%arg0: i32, %arg1: i32, %arg2: i32) -> (i32, i32) {
    %c0_i32 = arith.constant 0 : i32
    %c0_i32_0 = arith.constant 0 : i32
    return %c0_i32, %arg1 : i32, i32
  }
  func.func @transform_3(%arg0: i32, %arg1: i32, %arg2: i32) -> (i32, i32) {
    %c0_i32 = arith.constant 0 : i32
    return %arg0, %arg1 : i32, i32
  }
}

module attributes {stable_mosaic.version = 11 : i64} {
  func.func @_matmul_fused_kernel(%arg0: i32, %arg1: i32, %arg2: i32, %arg3: memref<16x128xbf16, #tpu.memory_space<vmem>>, %arg4: memref<128x64xbf16, #tpu.memory_space<vmem>>, %arg5: memref<1x64xf32, #tpu.memory_space<vmem>>, %arg6: memref<16x64xbf16, #tpu.memory_space<vmem>>, %arg7: memref<1x64xf32, #tpu.memory_space<vmem>>, %arg8: memref<1x64xf32, #tpu.memory_space<vmem>>, %arg9: memref<16x64xbf16, #tpu.memory_space<vmem>>, %arg10: memref<16x64xf32, #tpu.memory_space<vmem>>) attributes {dimension_semantics = [#tpu.dimension_semantics<parallel>, #tpu.dimension_semantics<parallel>, #tpu.dimension_semantics<arbitrary>], iteration_bounds = array<i64: 1, 1, 1>, scalar_prefetch = 0 : i64, scratch_operands = 1 : i64, tpu.core_type = #tpu.core_type<tc>, window_params = [{transform_indices = @transform_0, window_bounds = array<i64: 16, 128>}, {transform_indices = @transform_1, window_bounds = array<i64: 128, 64>}, {transform_indices = @transform_2, window_bounds = array<i64: 1, 64>}, {transform_indices = @transform_3, window_bounds = array<i64: 16, 64>}, {transform_indices = @transform_4, window_bounds = array<i64: 1, 64>}, {transform_indices = @transform_5, window_bounds = array<i64: 1, 64>}, {transform_indices = @transform_6, window_bounds = array<i64: 16, 64>}]} {
    %c0_i32 = arith.constant 0 : i32
    %0 = arith.cmpi eq, %arg2, %c0_i32 : i32
    %1 = arith.extui %0 : i1 to i32
    %c0_i32_0 = arith.constant 0 : i32
    %2 = arith.cmpi ne, %1, %c0_i32_0 : i32
    scf.if %2 {
      %cst_10 = arith.constant 0.000000e+00 : f32
      %12 = vector.broadcast %cst_10 : f32 to vector<16x64xf32>
      %c0_11 = arith.constant 0 : index
      %c0_12 = arith.constant 0 : index
      %13 = vector.load %arg10[%c0_11, %c0_12] : memref<16x64xf32, #tpu.memory_space<vmem>>, vector<16x64xf32>
      tpu.vector_store %arg10[%c0_11, %c0_12], %12 {strides = array<i32>} : memref<16x64xf32, #tpu.memory_space<vmem>>, vector<16x64xf32>,
    } else {
    }
    %c0 = arith.constant 0 : index
    %c0_1 = arith.constant 0 : index
    %3 = vector.load %arg10[%c0, %c0_1] : memref<16x64xf32, #tpu.memory_space<vmem>>, vector<16x64xf32>
    %c0_2 = arith.constant 0 : index
    %c0_3 = arith.constant 0 : index
    %4 = vector.load %arg3[%c0_2, %c0_3] : memref<16x128xbf16, #tpu.memory_space<vmem>>, vector<16x128xbf16>
    %c0_4 = arith.constant 0 : index
    %c0_5 = arith.constant 0 : index
    %5 = vector.load %arg4[%c0_4, %c0_5] : memref<128x64xbf16, #tpu.memory_space<vmem>>, vector<128x64xbf16>
    %cst = arith.constant dense<0.000000e+00> : vector<16x64xf32>
    %6 = tpu.matmul %4, %5, %cst {dimension_numbers = #tpu.dot_dimension_numbers<[1], [0], [0], [1], [0, 0, 1, 1], [], []>} : vector<16x128xbf16>, vector<128x64xbf16>, vector<16x64xf32> -> vector<16x64xf32>
    %7 = arith.addf %3, %6 : vector<16x64xf32>
    %c0_6 = arith.constant 0 : index
    %c0_7 = arith.constant 0 : index
    %8 = vector.load %arg10[%c0_6, %c0_7] : memref<16x64xf32, #tpu.memory_space<vmem>>, vector<16x64xf32>
    tpu.vector_store %arg10[%c0_6, %c0_7], %7 {strides = array<i32>} : memref<16x64xf32, #tpu.memory_space<vmem>>, vector<16x64xf32>,
    %c0_i32_8 = arith.constant 0 : i32
    %9 = arith.cmpi eq, %arg2, %c0_i32_8 : i32
    %10 = arith.extui %9 : i1 to i32
    %c0_i32_9 = arith.constant 0 : i32
    %11 = arith.cmpi ne, %10, %c0_i32_9 : i32
    scf.if %11 {
      %c0_10 = arith.constant 0 : index
      %c0_11 = arith.constant 0 : index
      %12 = vector.load %arg10[%c0_10, %c0_11] : memref<16x64xf32, #tpu.memory_space<vmem>>, vector<16x64xf32>
      %c0_12 = arith.constant 0 : index
      %c0_13 = arith.constant 0 : index
      %13 = vector.load %arg5[%c0_12, %c0_13] : memref<1x64xf32, #tpu.memory_space<vmem>>, vector<1x64xf32>
      %14 = vector.broadcast %13 : vector<1x64xf32> to vector<16x64xf32>
      %15 = arith.addf %12, %14 : vector<16x64xf32>
      %c0_14 = arith.constant 0 : index
      %c0_15 = arith.constant 0 : index
      %16 = vector.load %arg6[%c0_14, %c0_15] : memref<16x64xbf16, #tpu.memory_space<vmem>>, vector<16x64xbf16>
      %17 = arith.extf %16 : vector<16x64xbf16> to vector<16x64xf32>
      %18 = arith.addf %15, %17 : vector<16x64xf32>
      %cst_16 = arith.constant dense<0.000000e+00> : vector<16xf32>
      %19 = vector.multi_reduction <add>, %18, %cst_16 [1] : vector<16x64xf32> to vector<16xf32>
      %20 = vector.shape_cast %19 : vector<16xf32> to vector<16x1xf32>
      %cst_17 = arith.constant 6.400000e+01 : f32
      %21 = vector.broadcast %cst_17 : f32 to vector<16x1xf32>
      %22 = arith.divf %20, %21 : vector<16x1xf32>
      %23 = vector.broadcast %22 : vector<16x1xf32> to vector<16x64xf32>
      %24 = arith.subf %18, %23 : vector<16x64xf32>
      %25 = arith.mulf %24, %24 : vector<16x64xf32>
      %cst_18 = arith.constant dense<0.000000e+00> : vector<16xf32>
      %26 = vector.multi_reduction <add>, %25, %cst_18 [1] : vector<16x64xf32> to vector<16xf32>
      %27 = vector.shape_cast %26 : vector<16xf32> to vector<16x1xf32>
      %cst_19 = arith.constant 6.400000e+01 : f32
      %28 = vector.broadcast %cst_19 : f32 to vector<16x1xf32>
      %29 = arith.divf %27, %28 : vector<16x1xf32>
      %cst_20 = arith.constant 9.99999996E-13 : f32
      %30 = vector.broadcast %cst_20 : f32 to vector<16x1xf32>
      %31 = arith.addf %29, %30 : vector<16x1xf32>
      %32 = math.rsqrt %31 : vector<16x1xf32>
      %33 = vector.broadcast %32 : vector<16x1xf32> to vector<16x64xf32>
      %34 = arith.mulf %24, %33 : vector<16x64xf32>
      %c0_21 = arith.constant 0 : index
      %c0_22 = arith.constant 0 : index
      %35 = vector.load %arg7[%c0_21, %c0_22] : memref<1x64xf32, #tpu.memory_space<vmem>>, vector<1x64xf32>
      %36 = vector.broadcast %35 : vector<1x64xf32> to vector<16x64xf32>
      %37 = arith.mulf %34, %36 : vector<16x64xf32>
      %c0_23 = arith.constant 0 : index
      %c0_24 = arith.constant 0 : index
      %38 = vector.load %arg8[%c0_23, %c0_24] : memref<1x64xf32, #tpu.memory_space<vmem>>, vector<1x64xf32>
      %39 = vector.broadcast %38 : vector<1x64xf32> to vector<16x64xf32>
      %40 = arith.addf %37, %39 : vector<16x64xf32>
      %41 = arith.truncf %40 : vector<16x64xf32> to vector<16x64xbf16>
      %c0_25 = arith.constant 0 : index
      %c0_26 = arith.constant 0 : index
      %42 = vector.load %arg9[%c0_25, %c0_26] : memref<16x64xbf16, #tpu.memory_space<vmem>>, vector<16x64xbf16>
      tpu.vector_store %arg9[%c0_25, %c0_26], %41 {strides = array<i32>} : memref<16x64xbf16, #tpu.memory_space<vmem>>, vector<16x64xbf16>,
    } else {
    }
    return
  }
  func.func @transform_0(%arg0: i32, %arg1: i32, %arg2: i32) -> (i32, i32) {
    %c0_i32 = arith.constant 0 : i32
    return %arg0, %arg2 : i32, i32
  }
  func.func @transform_1(%arg0: i32, %arg1: i32, %arg2: i32) -> (i32, i32) {
    %c0_i32 = arith.constant 0 : i32
    return %arg2, %arg1 : i32, i32
  }
  func.func @transform_2(%arg0: i32, %arg1: i32, %arg2: i32) -> (i32, i32) {
    %c0_i32 = arith.constant 0 : i32
    %c0_i32_0 = arith.constant 0 : i32
    return %c0_i32, %arg1 : i32, i32
  }
  func.func @transform_3(%arg0: i32, %arg1: i32, %arg2: i32) -> (i32, i32) {
    %c0_i32 = arith.constant 0 : i32
    return %arg0, %arg1 : i32, i32
  }
  func.func @transform_4(%arg0: i32, %arg1: i32, %arg2: i32) -> (i32, i32) {
    %c0_i32 = arith.constant 0 : i32
    %c0_i32_0 = arith.constant 0 : i32
    return %c0_i32, %arg1 : i32, i32
  }
  func.func @transform_5(%arg0: i32, %arg1: i32, %arg2: i32) -> (i32, i32) {
    %c0_i32 = arith.constant 0 : i32
    %c0_i32_0 = arith.constant 0 : i32
    return %c0_i32, %arg1 : i32, i32
  }
  func.func @transform_6(%arg0: i32, %arg1: i32, %arg2: i32) -> (i32, i32) {
    %c0_i32 = arith.constant 0 : i32
    return %arg0, %arg1 : i32, i32
  }
}

module attributes {stable_mosaic.version = 11 : i64} {
  func.func @_classifier_kernel(%arg0: i32, %arg1: memref<2x64xbf16, #tpu.memory_space<vmem>>, %arg2: memref<64x4xbf16, #tpu.memory_space<vmem>>, %arg3: memref<1x4xf32, #tpu.memory_space<vmem>>, %arg4: memref<2x4xf32, #tpu.memory_space<vmem>>) attributes {dimension_semantics = [#tpu.dimension_semantics<arbitrary>], iteration_bounds = array<i64: 1>, scalar_prefetch = 0 : i64, scratch_operands = 0 : i64, tpu.core_type = #tpu.core_type<tc>, window_params = [{pipeline_mode = #tpu.pipeline_mode<synchronous>, transform_indices = @transform_0, window_bounds = array<i64: 2, 64>}, {pipeline_mode = #tpu.pipeline_mode<synchronous>, transform_indices = @transform_1, window_bounds = array<i64: 64, 4>}, {pipeline_mode = #tpu.pipeline_mode<synchronous>, transform_indices = @transform_2, window_bounds = array<i64: 1, 4>}, {pipeline_mode = #tpu.pipeline_mode<synchronous>, transform_indices = @transform_3, window_bounds = array<i64: 2, 4>}]} {
    %c0 = arith.constant 0 : index
    %c0_0 = arith.constant 0 : index
    %0 = vector.load %arg1[%c0, %c0_0] : memref<2x64xbf16, #tpu.memory_space<vmem>>, vector<2x64xbf16>
    %c0_1 = arith.constant 0 : index
    %c0_2 = arith.constant 0 : index
    %1 = vector.load %arg2[%c0_1, %c0_2] : memref<64x4xbf16, #tpu.memory_space<vmem>>, vector<64x4xbf16>
    %cst = arith.constant dense<0.000000e+00> : vector<2x4xf32>
    %2 = tpu.matmul %0, %1, %cst {dimension_numbers = #tpu.dot_dimension_numbers<[1], [0], [0], [1], [0, 0, 1, 1], [], []>} : vector<2x64xbf16>, vector<64x4xbf16>, vector<2x4xf32> -> vector<2x4xf32>
    %c0_3 = arith.constant 0 : index
    %c0_4 = arith.constant 0 : index
    %3 = vector.load %arg3[%c0_3, %c0_4] : memref<1x4xf32, #tpu.memory_space<vmem>>, vector<1x4xf32>
    %4 = vector.broadcast %3 : vector<1x4xf32> to vector<2x4xf32>
    %5 = arith.addf %2, %4 : vector<2x4xf32>
    %cst_5 = arith.constant dense<0xFF800000> : vector<2xf32>
    %6 = vector.multi_reduction <maximumf>, %5, %cst_5 [1] : vector<2x4xf32> to vector<2xf32>
    %7 = vector.shape_cast %6 : vector<2xf32> to vector<2x1xf32>
    %8 = vector.broadcast %7 : vector<2x1xf32> to vector<2x4xf32>
    %9 = arith.subf %5, %8 : vector<2x4xf32>
    %10 = math.exp %9 : vector<2x4xf32>
    %cst_6 = arith.constant dense<0.000000e+00> : vector<2xf32>
    %11 = vector.multi_reduction <add>, %10, %cst_6 [1] : vector<2x4xf32> to vector<2xf32>
    %12 = vector.shape_cast %11 : vector<2xf32> to vector<2x1xf32>
    %13 = math.log %12 : vector<2x1xf32>
    %14 = vector.broadcast %13 : vector<2x1xf32> to vector<2x4xf32>
    %15 = arith.subf %9, %14 : vector<2x4xf32>
    %c0_7 = arith.constant 0 : index
    %c0_8 = arith.constant 0 : index
    %16 = vector.load %arg4[%c0_7, %c0_8] : memref<2x4xf32, #tpu.memory_space<vmem>>, vector<2x4xf32>
    tpu.vector_store %arg4[%c0_7, %c0_8], %15 {strides = array<i32>} : memref<2x4xf32, #tpu.memory_space<vmem>>, vector<2x4xf32>,
    return
  }
  func.func @transform_0(%arg0: i32) -> (i32, i32) {
    %c0_i32 = arith.constant 0 : i32
    %c0_i32_0 = arith.constant 0 : i32
    %c0_i32_1 = arith.constant 0 : i32
    return %c0_i32, %c0_i32_0 : i32, i32
  }
  func.func @transform_1(%arg0: i32) -> (i32, i32) {
    %c0_i32 = arith.constant 0 : i32
    %c0_i32_0 = arith.constant 0 : i32
    %c0_i32_1 = arith.constant 0 : i32
    return %c0_i32, %c0_i32_0 : i32, i32
  }
  func.func @transform_2(%arg0: i32) -> (i32, i32) {
    %c0_i32 = arith.constant 0 : i32
    %c0_i32_0 = arith.constant 0 : i32
    %c0_i32_1 = arith.constant 0 : i32
    return %c0_i32, %c0_i32_0 : i32, i32
  }
  func.func @transform_3(%arg0: i32) -> (i32, i32) {
    %c0_i32 = arith.constant 0 : i32
    %c0_i32_0 = arith.constant 0 : i32
    %c0_i32_1 = arith.constant 0 : i32
    return %c0_i32, %c0_i32_0 : i32, i32
  }
}

</mosaic_0001>

<llo_original>
// kernel: bert_for_sequence_classification.12
$region0: #{bert_for_sequence_classification.12}
  #allocation0 [shape = 'u32[]', space=smem, size = 0x4, offset = 0x4, fixed_abs, tag = 'smem constant byte address 0x4 - core index']
  #allocation1 [shape = 'u32[144,128]{1,0:T(1,128)}', space=vmem, size = 0x12000, scoped, tag = 'internal scratch']
  %s0 = inlined_call_operand.vmem [shape: f32[16,64], index: 0, kind: input, shape index: {}]
  %s1 = inlined_call_operand.vmem [shape: f32[1,64], index: 1, kind: input, shape index: {}]
  %s2 = inlined_call_operand.vmem [shape: f32[1,64], index: 2, kind: input, shape index: {}]
  %s3 = inlined_call_operand.vmem [shape: bf16[16,64], index: 3, kind: output, shape index: {}]
  %s4 = sld [smem:[#allocation0]]
  $region22: #{bert_for_sequence_classification.12} parent=0
    _
  %s6 = ssub.s32 1, %s4
  %s7 = scalar_select 0, %s6, %s4
  // Predicated region
  $region2: #{bert_for_sequence_classification.12} parent=0 // pred_check
    _
  $region3: #{bert_for_sequence_classification.12} parent=0 // pred_check_branch
    %9 = sbr.rel (0) target = $region5
  $region4: #{bert_for_sequence_classification.12} parent=0 // pred_region
    _
  $region5: #{bert_for_sequence_classification.12} parent=0 // pred_fallthru
    _
  // Predicated region
  $region6: #{bert_for_sequence_classification.12} parent=0 // pred_check
    _
  $region7: #{bert_for_sequence_classification.12} parent=0 // pred_check_branch
    %11 = sbr.rel (0) target = $region9
  $region8: #{bert_for_sequence_classification.12} parent=0 // pred_region
    _
  $region9: #{bert_for_sequence_classification.12} parent=0 // pred_fallthru
    _
  // Predicated region
  $region10: #{bert_for_sequence_classification.12} parent=0 // pred_check
    _
  $region11: #{bert_for_sequence_classification.12} parent=0 // pred_check_branch
    %13 = sbr.rel (0) target = $region13
  $region12: #{bert_for_sequence_classification.12} parent=0 // pred_region
    _
  $region13: #{bert_for_sequence_classification.12} parent=0 // pred_fallthru
    _
  %v14 = vld [vmem:[%s0] sm:$0xff]
  %v15 = vld [vmem:[%s0 + $0x8] sm:$0xff]
  %vm16 = vcmask 523264
  %v17 = vsel %vm16, %v14, 0.0
  %18 = vadd.xlane.f32.xlu0 %v17
  %v19 = vpop.xlane.xlu0 %18
  %v20 = vsel %vm16, %v15, 0.0
  %21 = vadd.xlane.f32.xlu0 %v20
  %v22 = vpop.xlane.xlu0 %21
  %v23 = vrcp.pop 64.0
  %v24 = vmul.f32 %v19, %v23
  %v25 = vmul.f32 %v22, %v23
  %v26 = vsub.f32 %v14, %v24
  %v27 = vsub.f32 %v15, %v25
  %v28 = vmul.f32 %v26, %v26
  %v29 = vmul.f32 %v27, %v27
  %v30 = vsel %vm16, %v28, 0.0
  %31 = vadd.xlane.f32.xlu0 %v30
  %v32 = vpop.xlane.xlu0 %31
  %v33 = vsel %vm16, %v29, 0.0
  %34 = vadd.xlane.f32.xlu0 %v33
  %v35 = vpop.xlane.xlu0 %34
  %v36 = vmul.f32 %v32, %v23
  %v37 = vmul.f32 %v35, %v23
  %v38 = vadd.f32 %v36, 1e-12
  %v39 = vadd.f32 %v37, 1e-12
  %v40 = vrsqrt.pop %v38
  %v41 = vrsqrt.pop %v39
  %v42 = vmul.f32 %v26, %v40
  %v43 = vmul.f32 %v27, %v41
  %v44 = vld [vmem:[%s1] sm:$0x1]
  %v46 = vlaneseq
  %v47 = vshrl.u32 %v46, 7
  %v48 = vsub.s32 0, %v47
  %v49 = vrot.slane %v44, %v48
  %v51 = vmul.f32 %v42, %v49
  %v52 = vmul.f32 %v43, %v49
  %v53 = vld [vmem:[%s2] sm:$0x1]
  %v55 = vlaneseq
  %v56 = vshrl.u32 %v55, 7
  %v57 = vsub.s32 0, %v56
  %v58 = vrot.slane %v53, %v57
  %v60 = vadd.f32 %v51, %v58
  %v61 = vadd.f32 %v52, %v58
  %v62 = vpack.c.bf16 %v61, %v60
  %v64 = vunpack.c.l.b16 %v62
  %v65 = vunpack.c.h.b16 %v62
  %v66 = vpack.c.b16 %v64, %v64
  %v67 = vpack.c.b16 %v65, %v65
  %vm70 = vcmask 519168
  %71 = vst.msk [vmem:[%s3] sm:$0xf] %vm70, %v66
  %72 = vst.msk [vmem:[%s3 + $0x4] sm:$0xf] %vm70, %v67
  // Predicated region
  $region14: #{bert_for_sequence_classification.12} parent=0 // pred_check
    _
  $region15: #{bert_for_sequence_classification.12} parent=0 // pred_check_branch
    %74 = sbr.rel (0) target = $region17
  $region16: #{bert_for_sequence_classification.12} parent=0 // pred_region
    _
  $region17: #{bert_for_sequence_classification.12} parent=0 // pred_fallthru
    _
  // Predicated region
  $region18: #{bert_for_sequence_classification.12} parent=0 // pred_check
    _
  $region19: #{bert_for_sequence_classification.12} parent=0 // pred_check_branch
    %76 = sbr.rel (0) target = $region21
  $region20: #{bert_for_sequence_classification.12} parent=0 // pred_region
    _
  $region21: #{bert_for_sequence_classification.12} parent=0 // pred_fallthru
    _

// kernel: bert_for_sequence_classification.13
$region0: #{bert_for_sequence_classification.13}
  #allocation0 [shape = 'u32[]', space=smem, size = 0x4, offset = 0x4, fixed_abs, tag = 'smem constant byte address 0x4 - core index']
  #allocation1 [shape = 'u32[144,128]{1,0:T(1,128)}', space=vmem, size = 0x12000, scoped, tag = 'internal scratch']
  #allocation2 [shape = 'f32[16,192]{1,0:T(8,128)}', space=vmem, size = 0x4000, scoped, tag = 'scratch operand']
  %s0 = inlined_call_operand.vmem [shape: bf16[16,64], index: 0, kind: input, shape index: {}]
  %s1 = inlined_call_operand.vmem [shape: bf16[64,192], index: 1, kind: input, shape index: {}]
  %s2 = inlined_call_operand.vmem [shape: f32[1,192], index: 2, kind: input, shape index: {}]
  %s3 = inlined_call_operand.vmem [shape: bf16[16,192], index: 3, kind: output, shape index: {}]
  %s4 = sld [smem:[#allocation0]]
  $region30: #{bert_for_sequence_classification.13} parent=0
    _
  %s6 = ssub.s32 1, %s4
  %s7 = scalar_select 0, %s6, %s4
  // Predicated region
  $region2: #{bert_for_sequence_classification.13} parent=0 // pred_check
    _
  $region3: #{bert_for_sequence_classification.13} parent=0 // pred_check_branch
    %9 = sbr.rel (0) target = $region5
  $region4: #{bert_for_sequence_classification.13} parent=0 // pred_region
    _
  $region5: #{bert_for_sequence_classification.13} parent=0 // pred_fallthru
    _
  // Predicated region
  $region6: #{bert_for_sequence_classification.13} parent=0 // pred_check
    _
  $region7: #{bert_for_sequence_classification.13} parent=0 // pred_check_branch
    %11 = sbr.rel (0) target = $region9
  $region8: #{bert_for_sequence_classification.13} parent=0 // pred_region
    _
  $region9: #{bert_for_sequence_classification.13} parent=0 // pred_fallthru
    _
  // Predicated region
  $region10: #{bert_for_sequence_classification.13} parent=0 // pred_check
    _
  $region11: #{bert_for_sequence_classification.13} parent=0 // pred_check_branch
    %13 = sbr.rel (0) target = $region13
  $region12: #{bert_for_sequence_classification.13} parent=0 // pred_region
    _
  $region13: #{bert_for_sequence_classification.13} parent=0 // pred_fallthru
    _
  %p15 = scmp.eq.s32.totalorder 0, 0
  // Predicated region
  $region14: #{bert_for_sequence_classification.13} parent=0 // pred_check
    %p16 = pneg %p15
  $region15: #{bert_for_sequence_classification.13} parent=0 // pred_check_branch
    %18 = sbr.rel (%p16) target = $region17
  $region16: #{bert_for_sequence_classification.13} parent=0 // pred_region
    %19 = vst [vmem:[#allocation2] sm:$0xff] 0.0
    %vm20 = vcmask 523264
    %21 = vst.msk [vmem:[#allocation2 + $0x8] sm:$0xff] %vm20, 0.0
    %22 = vst [vmem:[#allocation2 + $0x10] sm:$0xff] 0.0
    %23 = vst.msk [vmem:[#allocation2 + $0x18] sm:$0xff] %vm20, 0.0
  $region17: #{bert_for_sequence_classification.13} parent=0 // pred_fallthru
    _
  %v24 = vld [vmem:[#allocation2] sm:$0xff]
  %v25 = vld [vmem:[#allocation2 + $0x8] sm:$0xff]
  %v26 = vld [vmem:[#allocation2 + $0x10] sm:$0xff]
  %v27 = vld [vmem:[#allocation2 + $0x18] sm:$0xff]
  %v28 = vld [vmem:[%s0] sm:$0xf]
  %v29 = vld [vmem:[%s0 + $0x4] sm:$0xf]
  %v30 = vld [vmem:[%s1] sm:$0xff]
  %v31 = vld [vmem:[%s1 + $0x8] sm:$0xff]
  %v32 = vld [vmem:[%s1 + $0x10] sm:$0xff]
  %v33 = vld [vmem:[%s1 + $0x18] sm:$0xff]
  %v34 = vld [vmem:[%s1 + $0x20] sm:$0xff]
  %v35 = vld [vmem:[%s1 + $0x28] sm:$0xff]
  %v36 = vld [vmem:[%s1 + $0x30] sm:$0xff]
  %v37 = vld [vmem:[%s1 + $0x38] sm:$0xff]
  %v40 = vunpack.c.l.b16 %v28
  %v41 = vunpack.c.l.b16 %v29
  %v42 = vpack.c.b16 %v41, %v40
  %v51 = vunpack.c.l.b16 %v30
  %v52 = vunpack.c.h.b16 %v30
  %v53 = vunpack.c.l.b16 %v31
  %v54 = vunpack.c.h.b16 %v31
  %v55 = vunpack.c.l.b16 %v32
  %v56 = vunpack.c.h.b16 %v32
  %v57 = vunpack.c.l.b16 %v33
  %v58 = vunpack.c.h.b16 %v33
  %v59 = vunpack.c.l.b16 %v34
  %v60 = vunpack.c.h.b16 %v34
  %v61 = vunpack.c.l.b16 %v35
  %v62 = vunpack.c.h.b16 %v35
  %v63 = vunpack.c.l.b16 %v36
  %v64 = vunpack.c.h.b16 %v36
  %v65 = vunpack.c.l.b16 %v37
  %v66 = vunpack.c.h.b16 %v37
  %v67 = vpack.c.b16 %v53, %v51
  %v68 = vpack.c.b16 %v54, %v52
  %v69 = vpack.c.b16 %v57, %v55
  %v70 = vpack.c.b16 %v58, %v56
  %v71 = vpack.c.b16 %v61, %v59
  %v72 = vpack.c.b16 %v62, %v60
  %v73 = vpack.c.b16 %v65, %v63
  %v74 = vpack.c.b16 %v66, %v64
  %vm83 = vcmask 523264
  %v85 = vsel %vm83, %v42, 0
  %87 = vmatprep.subr.bf16.mxu0 %v68
  %88 = vmatpush1.bf16.msra.mxu0 %v67
  %89 = vmatprep.subr.bf16.mxu0 %v70
  %90 = vmatpush1.bf16.msra.mxu0 %v69
  %91 = vmatprep.subr.bf16.mxu0 %v72
  %92 = vmatpush1.bf16.msra.mxu0 %v71
  %93 = vmatprep.subr.bf16.mxu0 %v74
  %94 = vmatpush1.bf16.msra.mxu0 %v73
  %95 = vmatprep.subr.bf16.mxu0 0
  %96 = vmatpush1.bf16.msra.mxu0 0
  %97 = vmatprep.subr.bf16.mxu0 0
  %98 = vmatpush1.bf16.msra.mxu0 0
  %99 = vmatprep.subr.bf16.mxu0 0
  %100 = vmatpush1.bf16.msra.mxu0 0
  %101 = vmatprep.subr.bf16.mxu0 0
  %102 = vmatpush1.bf16.msra.mxu0 0
  %103 = vmatprep.subr.bf16.mxu0 0
  %104 = vmatpush1.bf16.msra.mxu0 0
  %105 = vmatprep.subr.bf16.mxu0 0
  %106 = vmatpush1.bf16.msra.mxu0 0
  %107 = vmatprep.subr.bf16.mxu0 0
  %108 = vmatpush1.bf16.msra.mxu0 0
  %109 = vmatprep.subr.bf16.mxu0 0
  %110 = vmatpush1.bf16.msra.mxu0 0
  %111 = vmatprep.subr.bf16.mxu0 0
  %112 = vmatpush1.bf16.msra.mxu0 0
  %113 = vmatprep.subr.bf16.mxu0 0
  %114 = vmatpush1.bf16.msra.mxu0 0
  %115 = vmatprep.subr.bf16.mxu0 0
  %116 = vmatpush1.bf16.msra.mxu0 0
  %117 = vmatprep.subr.bf16.mxu0 0
  %118 = vmatpush1.bf16.msra.mxu0 0
  %119 = vmatprep.mubr.bf16.mxu0 0
  %120 = vmatmul.mubr.bf16.gmra.mrb[0].mxu0 %v85
  %v121 = vpop.f32.mrb[0].mxu0
  %v122 = vadd.f32 0.0, %v121
  %v123 = vpop.f32.mrb[0].mxu0
  %v124 = vadd.f32 0.0, %v123
  %v125 = vpop.f32.mrb[0].mxu0
  %v126 = vadd.f32 0.0, %v125
  %v127 = vpop.f32.mrb[0].mxu0
  %v128 = vadd.f32 0.0, %v127
  %129 = vdwg.mxu0
  %v130 = vadd.f32 %v24, %v122
  %v131 = vadd.f32 %v25, %v124
  %v132 = vadd.f32 %v26, %v126
  %v133 = vadd.f32 %v27, %v128
  %134 = vst [vmem:[#allocation2] sm:$0xff] %v130
  %135 = vst.msk [vmem:[#allocation2 + $0x8] sm:$0xff] %vm83, %v131
  %136 = vst [vmem:[#allocation2 + $0x10] sm:$0xff] %v132
  %137 = vst.msk [vmem:[#allocation2 + $0x18] sm:$0xff] %vm83, %v133
  // Predicated region
  $region18: #{bert_for_sequence_classification.13} parent=0 // pred_check
    %p138 = pneg %p15
  $region19: #{bert_for_sequence_classification.13} parent=0 // pred_check_branch
    %140 = sbr.rel (%p138) target = $region21
  $region20: #{bert_for_sequence_classification.13} parent=0 // pred_region
    %v141 = vld [vmem:[#allocation2] sm:$0xff]
    %v142 = vld [vmem:[#allocation2 + $0x8] sm:$0xff]
    %v143 = vld [vmem:[#allocation2 + $0x10] sm:$0xff]
    %v144 = vld [vmem:[#allocation2 + $0x18] sm:$0xff]
    %v145 = vld [vmem:[%s2] sm:$0x3]
    %v147 = vlaneseq
    %v148 = vshrl.u32 %v147, 7
    %v149 = vsub.s32 0, %v148
    %v150 = vrot.slane %v145, %v149
    %v151 = vlaneseq
    %v152 = vshrl.u32 %v151, 7
    %v153 = vsub.s32 1, %v152
    %v154 = vrot.slane %v145, %v153
    %v157 = vadd.f32 %v141, %v150
    %v158 = vadd.f32 %v142, %v154
    %v159 = vadd.f32 %v143, %v150
    %v160 = vadd.f32 %v144, %v154
    %v161 = vpack.c.bf16 %v159, %v157
    %v162 = vpack.c.bf16 %v160, %v158
    %v165 = vunpack.c.l.b16 %v161
    %v166 = vunpack.c.l.b16 %v162
    %v167 = vunpack.c.h.b16 %v161
    %v168 = vunpack.c.h.b16 %v162
    %v169 = vpack.c.b16 %v166, %v165
    %v170 = vpack.c.b16 %v168, %v167
    %vm173 = vcmask 1043456
    %vm174 = vcmask 523268
    %vm175 = vmor %vm174, %vm173
    %176 = vst.msk [vmem:[%s3] sm:$0xff] %vm175, %v169
    %177 = vst.msk [vmem:[%s3 + $0x8] sm:$0xff] %vm175, %v170
  $region21: #{bert_for_sequence_classification.13} parent=0 // pred_fallthru
    _
  // Predicated region
  $region22: #{bert_for_sequence_classification.13} parent=0 // pred_check
    _
  $region23: #{bert_for_sequence_classification.13} parent=0 // pred_check_branch
    %179 = sbr.rel (0) target = $region25
  $region24: #{bert_for_sequence_classification.13} parent=0 // pred_region
    _
  $region25: #{bert_for_sequence_classification.13} parent=0 // pred_fallthru
    _
  // Predicated region
  $region26: #{bert_for_sequence_classification.13} parent=0 // pred_check
    _
  $region27: #{bert_for_sequence_classification.13} parent=0 // pred_check_branch
    %181 = sbr.rel (0) target = $region29
  $region28: #{bert_for_sequence_classification.13} parent=0 // pred_region
    _
  $region29: #{bert_for_sequence_classification.13} parent=0 // pred_fallthru
    _

// kernel: bert_for_sequence_classification.14
$region0: #{bert_for_sequence_classification.14}
  #allocation0 [shape = 'u32[]', space=smem, size = 0x4, offset = 0x4, fixed_abs, tag = 'smem constant byte address 0x4 - core index']
  #allocation1 [shape = 'u32[144,128]{1,0:T(1,128)}', space=vmem, size = 0x12000, scoped, tag = 'internal scratch']
  %s0 = inlined_call_operand.vmem [shape: bf16[16,192], index: 0, kind: input, shape index: {}]
  %s1 = inlined_call_operand.vmem [shape: f32[2,1,8], index: 1, kind: input, shape index: {}]
  %s2 = inlined_call_operand.vmem [shape: bf16[16,64], index: 2, kind: output, shape index: {}]
  %s3 = sld [smem:[#allocation0]]
  $region41: #{bert_for_sequence_classification.14} parent=0
    _
  %s5 = ssub.s32 1, %s3
  %s6 = scalar_select 0, %s5, %s3
  loop: start=0, step=1, limit=4
  $region2: #{bert_for_sequence_classification.14} parent=0 // loop_pre_header
    _
  $region3: #{bert_for_sequence_classification.14} parent=0 // loop_header
    %s8 = sphi 0, %s12
    %p9 = scmp.ge.s32.totalorder %s8, 4
    %s18 = sphi 0, %s20
    %s21 = sphi 0, %s18
    %s22 = sphi 0, %s21
    %s38 = sphi 0, %s22
    %s44 = sphi 0, %s46
    %s47 = sphi 0, %s44
    %s48 = sphi 0, %s47
    %s64 = sphi 0, %s48
    %s70 = sphi 0, %s72
    %s73 = sphi 0, %s70
    %s74 = sphi 0, %s73
    %s90 = sphi 0, %s74
  $region4: #{bert_for_sequence_classification.14} parent=0 // loop_header_branch
    %11 = sbr.rel (%p9) target = $region8
  $region5: #{bert_for_sequence_classification.14} parent=0 // loop_body
    %s13 = ssub.s32 %s8, 1
    %s14 = ssub.s32 %s8, 2
    %s15 = sadd.s32 %s8, 1
    %s16 = ssub.s32 %s8, %s15
    %p17 = scmp.eq.s32.totalorder %s16, 0
    %s19 = sadd.s32 %s18, 1
    %s20 = scalar_select %p17, %s18, %s19
    %p23 = pneg %p17
    %p24 = scmp.eq.s32.totalorder %s8, 1
    %p25 = por %p23, %p24
    %p26 = scmp.ne.s32.totalorder %s18, %s21
    %p27 = scmp.eq.s32.totalorder %s8, 0
    %p28 = por %p26, %p27
    %p29 = scmp.ne.s32.totalorder %s18, %s21
    %p30 = scmp.eq.s32.totalorder %s13, 1
    %p31 = por %p29, %p30
    %p32 = scmp.ne.s32.totalorder %s21, %s22
    %p33 = scmp.eq.s32.totalorder %s13, 0
    %p34 = por %p32, %p33
    %p35 = scmp.ne.s32.totalorder %s21, %s22
    %p36 = scmp.eq.s32.totalorder %s14, 1
    %p37 = por %p35, %p36
    %p39 = scmp.ne.s32.totalorder %s22, %s38
    %p40 = scmp.eq.s32.totalorder %s14, 0
    %p41 = por %p39, %p40
    %s42 = ssub.s32 %s8, %s15
    %p43 = scmp.eq.s32.totalorder %s42, 0
    %s45 = sadd.s32 %s44, 1
    %s46 = scalar_select %p43, %s44, %s45
    %p49 = pneg %p43
    %p50 = scmp.eq.s32.totalorder %s8, 1
    %p51 = por %p49, %p50
    %p52 = scmp.ne.s32.totalorder %s44, %s47
    %p53 = scmp.eq.s32.totalorder %s8, 0
    %p54 = por %p52, %p53
    %p55 = scmp.ne.s32.totalorder %s44, %s47
    %p56 = scmp.eq.s32.totalorder %s13, 1
    %p57 = por %p55, %p56
    %p58 = scmp.ne.s32.totalorder %s47, %s48
    %p59 = scmp.eq.s32.totalorder %s13, 0
    %p60 = por %p58, %p59
    %p61 = scmp.ne.s32.totalorder %s47, %s48
    %p62 = scmp.eq.s32.totalorder %s14, 1
    %p63 = por %p61, %p62
    %p65 = scmp.ne.s32.totalorder %s48, %s64
    %p66 = scmp.eq.s32.totalorder %s14, 0
    %p67 = por %p65, %p66
    %s68 = ssub.s32 %s8, %s15
    %p69 = scmp.eq.s32.totalorder %s68, 0
    %s71 = sadd.s32 %s70, 1
    %s72 = scalar_select %p69, %s70, %s71
    %p75 = pneg %p69
    %p76 = scmp.eq.s32.totalorder %s8, 1
    %p77 = por %p75, %p76
    %p78 = scmp.ne.s32.totalorder %s70, %s73
    %p79 = scmp.eq.s32.totalorder %s8, 0
    %p80 = por %p78, %p79
    %p81 = scmp.ne.s32.totalorder %s70, %s73
    %p82 = scmp.eq.s32.totalorder %s13, 1
    %p83 = por %p81, %p82
    %p84 = scmp.ne.s32.totalorder %s73, %s74
    %p85 = scmp.eq.s32.totalorder %s13, 0
    %p86 = por %p84, %p85
    %p87 = scmp.ne.s32.totalorder %s73, %s74
    %p88 = scmp.eq.s32.totalorder %s14, 1
    %p89 = por %p87, %p88
    %p91 = scmp.ne.s32.totalorder %s74, %s90
    %p92 = scmp.eq.s32.totalorder %s14, 0
    %p93 = por %p91, %p92
    %p94 = scmp.le.s32.totalorder 1, %s8
    %p95 = scmp.lt.s32.totalorder %s8, 3
    %p96 = pnand %p94, %p95
    %p97 = pneg %p96
    // Predicated region
    $region9: #{bert_for_sequence_classification.14} parent=5 // pred_check
      _
    $region10: #{bert_for_sequence_classification.14} parent=5 // pred_check_branch
      %99 = sbr.rel (%p96) target = $region12
    $region11: #{bert_for_sequence_classification.14} parent=5 // pred_region
      %s100 = ssub.s32 %s8, 1
    $region12: #{bert_for_sequence_classification.14} parent=5 // pred_fallthru
      _
    %p101 = scmp.lt.s32.totalorder %s8, 2
    // Predicated region
    $region13: #{bert_for_sequence_classification.14} parent=5 // pred_check
      %p102 = pneg %p101
    $region14: #{bert_for_sequence_classification.14} parent=5 // pred_check_branch
      %104 = sbr.rel (%p102) target = $region16
    $region15: #{bert_for_sequence_classification.14} parent=5 // pred_region
      // Predicated region
      $region17: #{bert_for_sequence_classification.14} parent=15 // pred_check
        %p105 = pneg %p28
      $region18: #{bert_for_sequence_classification.14} parent=15 // pred_check_branch
        %107 = sbr.rel (%p105) target = $region20
      $region19: #{bert_for_sequence_classification.14} parent=15 // pred_region
        %p108 = scmp.lt.s32.totalorder %s8, 1
        %s109 = scalar_select %p108, %s8, 1
        %s110 = smul.addr %s109, 2
        %s111 = smul.addr %s110, 4
        %s112 = scalar_lea.vmem %s0, %s111
      $region20: #{bert_for_sequence_classification.14} parent=15 // pred_fallthru
        _
      // Predicated region
      $region21: #{bert_for_sequence_classification.14} parent=15 // pred_check
        %p113 = pneg %p54
      $region22: #{bert_for_sequence_classification.14} parent=15 // pred_check_branch
        %115 = sbr.rel (%p113) target = $region24
      $region23: #{bert_for_sequence_classification.14} parent=15 // pred_region
        %p116 = scmp.lt.s32.totalorder %s8, 1
        %s117 = scalar_select %p116, %s8, 1
        %s118 = scalar_lea.vmem %s1, %s117
      $region24: #{bert_for_sequence_classification.14} parent=15 // pred_fallthru
        _
    $region16: #{bert_for_sequence_classification.14} parent=5 // pred_fallthru
      _
    %p119 = scmp.le.s32.totalorder 1, %s8
    %p120 = scmp.lt.s32.totalorder %s8, 3
    %p121 = pnand %p119, %p120
    %p122 = pneg %p121
    // Predicated region
    $region25: #{bert_for_sequence_classification.14} parent=5 // pred_check
      _
    $region26: #{bert_for_sequence_classification.14} parent=5 // pred_check_branch
      %124 = sbr.rel (%p121) target = $region28
    $region27: #{bert_for_sequence_classification.14} parent=5 // pred_region
      %s125 = ssub.s32 %s8, 1
      %p126 = scmp.lt.s32.totalorder %s13, 1
      %s127 = scalar_select %p126, %s13, 1
      %s128 = smul.addr %s127, 2
      %s129 = smul.addr %s128, 4
      %s130 = scalar_lea.vmem %s0, %s129
      %p131 = pneg %p34
      %p132 = pneg %p31
      %p133 = scmp.lt.s32.totalorder %s13, 1
      %s134 = scalar_select %p133, %s13, 1
      %s135 = scalar_lea.vmem %s1, %s134
      %p136 = pneg %p60
      %p137 = pneg %p57
      %p138 = pneg %p86
      %p139 = pneg %p83
      %p140 = scmp.lt.s32.totalorder %s13, 1
      %s141 = scalar_select %p140, %s13, 1
      %s142 = smul.addr %s141, 4
      %s143 = scalar_lea.vmem %s2, %s142
      %p144 = scmp.lt.s32.totalorder %s13, 1
      %s145 = scalar_select %p144, %s13, 1
      %s146 = smul.addr %s145, 2
      %s147 = smul.addr %s146, 4
      %s148 = scalar_lea.vmem %s0, %s147
      %p149 = scmp.lt.s32.totalorder %s13, 1
      %s150 = scalar_select %p149, %s13, 1
      %s151 = scalar_lea.vmem %s1, %s150
      %p152 = scmp.lt.s32.totalorder %s13, 1
      %s153 = scalar_select %p152, %s13, 1
      %s154 = smul.addr %s153, 4
      %s155 = scalar_lea.vmem %s2, %s154
      %v157 = vld [vmem:[%s151] sm:$0x1]
      %v158 = vld [vmem:[%s148] sm:$0xf]
      %v159 = vld [vmem:[%s148 + $0x4] sm:$0xf]
      %v161 = vunpack.c.l.b16 %v158
      %v162 = vpack.c.b16 %v161, %v161
      %163 = vrot.lane.b32.xlu0 %v162, 64
      %v164 = vpop.permute.xlu0 %163
      %vm165 = vcmask 261120
      %v167 = vsel %vm165, %v158, 0
      %v170 = vsel %vm165, %v164, 0
      %172 = vmatprep.subr.bf16.mxu0 0
      %173 = vmatpush1.bf16.xpose.msra.mxu0 %v170
      %174 = vmatprep.subr.bf16.mxu0 0
      %175 = vmatpush1.bf16.xpose.msra.mxu0 0
      %176 = vmatprep.subr.bf16.mxu0 0
      %177 = vmatpush1.bf16.xpose.msra.mxu0 0
      %178 = vmatprep.subr.bf16.mxu0 0
      %179 = vmatpush1.bf16.xpose.msra.mxu0 0
      %180 = vmatprep.subr.bf16.mxu0 0
      %181 = vmatpush1.bf16.xpose.msra.mxu0 0
      %182 = vmatprep.subr.bf16.mxu0 0
      %183 = vmatpush1.bf16.xpose.msra.mxu0 0
      %184 = vmatprep.subr.bf16.mxu0 0
      %185 = vmatpush1.bf16.xpose.msra.mxu0 0
      %186 = vmatprep.subr.bf16.mxu0 0
      %187 = vmatpush1.bf16.xpose.msra.mxu0 0
      %188 = vmatprep.subr.bf16.mxu0 0
      %189 = vmatpush1.bf16.xpose.msra.mxu0 0
      %190 = vmatprep.subr.bf16.mxu0 0
      %191 = vmatpush1.bf16.xpose.msra.mxu0 0
      %192 = vmatprep.subr.bf16.mxu0 0
      %193 = vmatpush1.bf16.xpose.msra.mxu0 0
      %194 = vmatprep.subr.bf16.mxu0 0
      %195 = vmatpush1.bf16.xpose.msra.mxu0 0
      %196 = vmatprep.subr.bf16.mxu0 0
      %197 = vmatpush1.bf16.xpose.msra.mxu0 0
      %198 = vmatprep.subr.bf16.mxu0 0
      %199 = vmatpush1.bf16.xpose.msra.mxu0 0
      %200 = vmatprep.subr.bf16.mxu0 0
      %201 = vmatpush1.bf16.xpose.msra.mxu0 0
      %202 = vmatprep.subr.bf16.mxu0 0
      %203 = vmatpush1.bf16.xpose.msra.mxu0 0
      %204 = vmatprep.mubr.bf16.mxu0 0
      %205 = vmatmul.mubr.bf16.gmra.mrb[0].mxu0 %v167
      %v206 = vpop.f32.mrb[0].mxu0
      %v207 = vadd.f32 0.0, %v206
      %v208 = vpop.f32.mrb[0].mxu0
      %v209 = vpop.f32.mrb[0].mxu0
      %v210 = vpop.f32.mrb[0].mxu0
      %211 = vdwg.mxu0
      %v212 = vmul.f32 %v207, 0.17677669
      %v214 = vlaneseq
      %v215 = vshrl.u32 %v214, 7
      %v216 = vsub.s32 0, %v215
      %v217 = vrot.slane %v157, %v216
      %v219 = vadd.f32 %v212, %v217
      %vm220 = vcmask 64512
      %v221 = vsel %vm220, %v219, -inf
      %222 = vmax.xlane.f32.xlu0 %v221
      %v223 = vpop.xlane.xlu0 %222
      %v224 = vsub.f32 %v219, %v223
      %v225 = vmul.f32 %v224, 1.442695
      %v226 = vpow.pop %v225
      %v227 = vsel %vm220, %v226, 0.0
      %228 = vadd.xlane.f32.xlu0 %v227
      %v229 = vpop.xlane.xlu0 %228
      %v230 = vpack.c.bf16 %v226, %v226
      %v232 = vsel %vm220, %v230, 0
      %vm234 = vcmask 1043456
      %v236 = vsel %vm234, %v159, 0
      %238 = vmatprep.subr.bf16.mxu0 0
      %239 = vmatpush1.bf16.msra.mxu0 %v236
      %240 = vmatprep.subr.bf16.mxu0 0
      %241 = vmatpush1.bf16.msra.mxu0 0
      %242 = vmatprep.subr.bf16.mxu0 0
      %243 = vmatpush1.bf16.msra.mxu0 0
      %244 = vmatprep.subr.bf16.mxu0 0
      %245 = vmatpush1.bf16.msra.mxu0 0
      %246 = vmatprep.subr.bf16.mxu0 0
      %247 = vmatpush1.bf16.msra.mxu0 0
      %248 = vmatprep.subr.bf16.mxu0 0
      %249 = vmatpush1.bf16.msra.mxu0 0
      %250 = vmatprep.subr.bf16.mxu0 0
      %251 = vmatpush1.bf16.msra.mxu0 0
      %252 = vmatprep.subr.bf16.mxu0 0
      %253 = vmatpush1.bf16.msra.mxu0 0
      %254 = vmatprep.subr.bf16.mxu0 0
      %255 = vmatpush1.bf16.msra.mxu0 0
      %256 = vmatprep.subr.bf16.mxu0 0
      %257 = vmatpush1.bf16.msra.mxu0 0
      %258 = vmatprep.subr.bf16.mxu0 0
      %259 = vmatpush1.bf16.msra.mxu0 0
      %260 = vmatprep.subr.bf16.mxu0 0
      %261 = vmatpush1.bf16.msra.mxu0 0
      %262 = vmatprep.subr.bf16.mxu0 0
      %263 = vmatpush1.bf16.msra.mxu0 0
      %264 = vmatprep.subr.bf16.mxu0 0
      %265 = vmatpush1.bf16.msra.mxu0 0
      %266 = vmatprep.subr.bf16.mxu0 0
      %267 = vmatpush1.bf16.msra.mxu0 0
      %268 = vmatprep.subr.bf16.mxu0 0
      %269 = vmatpush1.bf16.msra.mxu0 0
      %270 = vmatprep.mubr.bf16.mxu0 0
      %271 = vmatmul.mubr.bf16.gmra.mrb[0].mxu0 %v232
      %v272 = vpop.f32.mrb[0].mxu0
      %v273 = vadd.f32 0.0, %v272
      %v274 = vpop.f32.mrb[0].mxu0
      %v275 = vpop.f32.mrb[0].mxu0
      %v276 = vpop.f32.mrb[0].mxu0
      %277 = vdwg.mxu0
      %v278 = vrcp.pop %v229
      %v279 = vmul.f32 %v273, %v278
      %280 = vrot.lane.b32.xlu0 %v162, 96
      %v281 = vpop.permute.xlu0 %280
      %282 = vrot.lane.b32.xlu0 %v162, 32
      %v283 = vpop.permute.xlu0 %282
      %v285 = vsel %vm165, %v281, 0
      %v288 = vsel %vm165, %v283, 0
      %290 = vmatprep.subr.bf16.mxu0 0
      %291 = vmatpush1.bf16.xpose.msra.mxu0 %v288
      %292 = vmatprep.subr.bf16.mxu0 0
      %293 = vmatpush1.bf16.xpose.msra.mxu0 0
      %294 = vmatprep.subr.bf16.mxu0 0
      %295 = vmatpush1.bf16.xpose.msra.mxu0 0
      %296 = vmatprep.subr.bf16.mxu0 0
      %297 = vmatpush1.bf16.xpose.msra.mxu0 0
      %298 = vmatprep.subr.bf16.mxu0 0
      %299 = vmatpush1.bf16.xpose.msra.mxu0 0
      %300 = vmatprep.subr.bf16.mxu0 0
      %301 = vmatpush1.bf16.xpose.msra.mxu0 0
      %302 = vmatprep.subr.bf16.mxu0 0
      %303 = vmatpush1.bf16.xpose.msra.mxu0 0
      %304 = vmatprep.subr.bf16.mxu0 0
      %305 = vmatpush1.bf16.xpose.msra.mxu0 0
      %306 = vmatprep.subr.bf16.mxu0 0
      %307 = vmatpush1.bf16.xpose.msra.mxu0 0
      %308 = vmatprep.subr.bf16.mxu0 0
      %309 = vmatpush1.bf16.xpose.msra.mxu0 0
      %310 = vmatprep.subr.bf16.mxu0 0
      %311 = vmatpush1.bf16.xpose.msra.mxu0 0
      %312 = vmatprep.subr.bf16.mxu0 0
      %313 = vmatpush1.bf16.xpose.msra.mxu0 0
      %314 = vmatprep.subr.bf16.mxu0 0
      %315 = vmatpush1.bf16.xpose.msra.mxu0 0
      %316 = vmatprep.subr.bf16.mxu0 0
      %317 = vmatpush1.bf16.xpose.msra.mxu0 0
      %318 = vmatprep.subr.bf16.mxu0 0
      %319 = vmatpush1.bf16.xpose.msra.mxu0 0
      %320 = vmatprep.subr.bf16.mxu0 0
      %321 = vmatpush1.bf16.xpose.msra.mxu0 0
      %322 = vmatprep.mubr.bf16.mxu0 0
      %323 = vmatmul.mubr.bf16.gmra.mrb[0].mxu0 %v285
      %v324 = vpop.f32.mrb[0].mxu0
      %v325 = vadd.f32 0.0, %v324
      %v326 = vpop.f32.mrb[0].mxu0
      %v327 = vpop.f32.mrb[0].mxu0
      %v328 = vpop.f32.mrb[0].mxu0
      %329 = vdwg.mxu0
      %v330 = vmul.f32 %v325, 0.17677669
      %v331 = vadd.f32 %v330, %v217
      %v332 = vsel %vm220, %v331, -inf
      %333 = vmax.xlane.f32.xlu0 %v332
      %v334 = vpop.xlane.xlu0 %333
      %v335 = vsub.f32 %v331, %v334
      %v336 = vmul.f32 %v335, 1.442695
      %v337 = vpow.pop %v336
      %v338 = vsel %vm220, %v337, 0.0
      %339 = vadd.xlane.f32.xlu0 %v338
      %v340 = vpop.xlane.xlu0 %339
      %v341 = vpack.c.bf16 %v337, %v337
      %v343 = vunpack.c.l.b16 %v159
      %v344 = vpack.c.b16 %v343, %v343
      %345 = vrot.lane.b32.xlu0 %v344, 96
      %v346 = vpop.permute.xlu0 %345
      %v348 = vsel %vm220, %v341, 0
      %v351 = vsel %vm234, %v346, 0
      %353 = vmatprep.subr.bf16.mxu0 0
      %354 = vmatpush1.bf16.msra.mxu0 %v351
      %355 = vmatprep.subr.bf16.mxu0 0
      %356 = vmatpush1.bf16.msra.mxu0 0
      %357 = vmatprep.subr.bf16.mxu0 0
      %358 = vmatpush1.bf16.msra.mxu0 0
      %359 = vmatprep.subr.bf16.mxu0 0
      %360 = vmatpush1.bf16.msra.mxu0 0
      %361 = vmatprep.subr.bf16.mxu0 0
      %362 = vmatpush1.bf16.msra.mxu0 0
      %363 = vmatprep.subr.bf16.mxu0 0
      %364 = vmatpush1.bf16.msra.mxu0 0
      %365 = vmatprep.subr.bf16.mxu0 0
      %366 = vmatpush1.bf16.msra.mxu0 0
      %367 = vmatprep.subr.bf16.mxu0 0
      %368 = vmatpush1.bf16.msra.mxu0 0
      %369 = vmatprep.subr.bf16.mxu0 0
      %370 = vmatpush1.bf16.msra.mxu0 0
      %371 = vmatprep.subr.bf16.mxu0 0
      %372 = vmatpush1.bf16.msra.mxu0 0
      %373 = vmatprep.subr.bf16.mxu0 0
      %374 = vmatpush1.bf16.msra.mxu0 0
      %375 = vmatprep.subr.bf16.mxu0 0
      %376 = vmatpush1.bf16.msra.mxu0 0
      %377 = vmatprep.subr.bf16.mxu0 0
      %378 = vmatpush1.bf16.msra.mxu0 0
      %379 = vmatprep.subr.bf16.mxu0 0
      %380 = vmatpush1.bf16.msra.mxu0 0
      %381 = vmatprep.subr.bf16.mxu0 0
      %382 = vmatpush1.bf16.msra.mxu0 0
      %383 = vmatprep.subr.bf16.mxu0 0
      %384 = vmatpush1.bf16.msra.mxu0 0
      %385 = vmatprep.mubr.bf16.mxu0 0
      %386 = vmatmul.mubr.bf16.gmra.mrb[0].mxu0 %v348
      %v387 = vpop.f32.mrb[0].mxu0
      %v388 = vadd.f32 0.0, %v387
      %v389 = vpop.f32.mrb[0].mxu0
      %v390 = vpop.f32.mrb[0].mxu0
      %v391 = vpop.f32.mrb[0].mxu0
      %392 = vdwg.mxu0
      %v393 = vrcp.pop %v340
      %v394 = vmul.f32 %v388, %v393
      %396 = vrot.lane.b32.xlu0 %v394, 32
      %v397 = vpop.permute.xlu0 %396
      %v399 = vsel %vm165, %v279, %v397
      %v400 = vpack.c.bf16 %v399, %v399
      %vm401 = vcmask 519168
      %402 = vst.msk [vmem:[%s155] sm:$0xf] %vm401, %v400
      %p403 = scmp.lt.s32.totalorder %s13, 1
      %s404 = scalar_select %p403, %s13, 1
      %s405 = smul.addr %s404, 4
      %s406 = scalar_lea.vmem %s2, %s405
      // Predicated region
      $region29: #{bert_for_sequence_classification.14} parent=27 // pred_check
        %p407 = pneg %p83
      $region30: #{bert_for_sequence_classification.14} parent=27 // pred_check_branch
        %409 = sbr.rel (%p407) target = $region32
      $region31: #{bert_for_sequence_classification.14} parent=27 // pred_region
        _
      $region32: #{bert_for_sequence_classification.14} parent=27 // pred_fallthru
        _
    $region28: #{bert_for_sequence_classification.14} parent=5 // pred_fallthru
      _
    %p410 = scmp.le.s32.totalorder 2, %s8
    // Predicated region
    $region33: #{bert_for_sequence_classification.14} parent=5 // pred_check
      %p411 = pneg %p410
    $region34: #{bert_for_sequence_classification.14} parent=5 // pred_check_branch
      %413 = sbr.rel (%p411) target = $region36
    $region35: #{bert_for_sequence_classification.14} parent=5 // pred_region
      %s414 = ssub.s32 %s8, 2
      // Predicated region
      $region37: #{bert_for_sequence_classification.14} parent=35 // pred_check
        %p415 = pneg %p89
      $region38: #{bert_for_sequence_classification.14} parent=35 // pred_check_branch
        %417 = sbr.rel (%p415) target = $region40
      $region39: #{bert_for_sequence_classification.14} parent=35 // pred_region
        %p418 = scmp.lt.s32.totalorder %s14, 1
        %s419 = scalar_select %p418, %s14, 1
        %s420 = smul.addr %s419, 4
        %s421 = scalar_lea.vmem %s2, %s420
      $region40: #{bert_for_sequence_classification.14} parent=35 // pred_fallthru
        _
    $region36: #{bert_for_sequence_classification.14} parent=5 // pred_fallthru
      _
  $region6: #{bert_for_sequence_classification.14} parent=0 // loop_footer
    %s12 = sadd.s32 1, %s8
  $region7: #{bert_for_sequence_classification.14} parent=0 // loop_footer_branch
    %7 = sbr.rel target = $region3
  $region8: #{bert_for_sequence_classification.14} parent=0 // loop_exit
    _

// kernel: bert_for_sequence_classification.15
$region0: #{bert_for_sequence_classification.15}
  #allocation0 [shape = 'u32[]', space=smem, size = 0x4, offset = 0x4, fixed_abs, tag = 'smem constant byte address 0x4 - core index']
  #allocation1 [shape = 'u32[144,128]{1,0:T(1,128)}', space=vmem, size = 0x12000, scoped, tag = 'internal scratch']
  #allocation2 [shape = 'f32[16,64]{1,0:T(8,128)}', space=vmem, size = 0x2000, scoped, tag = 'scratch operand']
  %s0 = inlined_call_operand.vmem [shape: bf16[16,64], index: 0, kind: input, shape index: {}]
  %s1 = inlined_call_operand.vmem [shape: bf16[64,64], index: 1, kind: input, shape index: {}]
  %s2 = inlined_call_operand.vmem [shape: f32[1,64], index: 2, kind: input, shape index: {}]
  %s3 = inlined_call_operand.vmem [shape: bf16[16,64], index: 3, kind: input, shape index: {}]
  %s4 = inlined_call_operand.vmem [shape: f32[1,64], index: 4, kind: input, shape index: {}]
  %s5 = inlined_call_operand.vmem [shape: f32[1,64], index: 5, kind: input, shape index: {}]
  %s6 = inlined_call_operand.vmem [shape: bf16[16,64], index: 6, kind: output, shape index: {}]
  %s7 = sld [smem:[#allocation0]]
  $region42: #{bert_for_sequence_classification.15} parent=0
    _
  %s9 = ssub.s32 1, %s7
  %s10 = scalar_select 0, %s9, %s7
  // Predicated region
  $region2: #{bert_for_sequence_classification.15} parent=0 // pred_check
    _
  $region3: #{bert_for_sequence_classification.15} parent=0 // pred_check_branch
    %12 = sbr.rel (0) target = $region5
  $region4: #{bert_for_sequence_classification.15} parent=0 // pred_region
    _
  $region5: #{bert_for_sequence_classification.15} parent=0 // pred_fallthru
    _
  // Predicated region
  $region6: #{bert_for_sequence_classification.15} parent=0 // pred_check
    _
  $region7: #{bert_for_sequence_classification.15} parent=0 // pred_check_branch
    %14 = sbr.rel (0) target = $region9
  $region8: #{bert_for_sequence_classification.15} parent=0 // pred_region
    _
  $region9: #{bert_for_sequence_classification.15} parent=0 // pred_fallthru
    _
  // Predicated region
  $region10: #{bert_for_sequence_classification.15} parent=0 // pred_check
    _
  $region11: #{bert_for_sequence_classification.15} parent=0 // pred_check_branch
    %16 = sbr.rel (0) target = $region13
  $region12: #{bert_for_sequence_classification.15} parent=0 // pred_region
    _
  $region13: #{bert_for_sequence_classification.15} parent=0 // pred_fallthru
    _
  // Predicated region
  $region14: #{bert_for_sequence_classification.15} parent=0 // pred_check
    _
  $region15: #{bert_for_sequence_classification.15} parent=0 // pred_check_branch
    %18 = sbr.rel (0) target = $region17
  $region16: #{bert_for_sequence_classification.15} parent=0 // pred_region
    _
  $region17: #{bert_for_sequence_classification.15} parent=0 // pred_fallthru
    _
  // Predicated region
  $region18: #{bert_for_sequence_classification.15} parent=0 // pred_check
    _
  $region19: #{bert_for_sequence_classification.15} parent=0 // pred_check_branch
    %20 = sbr.rel (0) target = $region21
  $region20: #{bert_for_sequence_classification.15} parent=0 // pred_region
    _
  $region21: #{bert_for_sequence_classification.15} parent=0 // pred_fallthru
    _
  // Predicated region
  $region22: #{bert_for_sequence_classification.15} parent=0 // pred_check
    _
  $region23: #{bert_for_sequence_classification.15} parent=0 // pred_check_branch
    %22 = sbr.rel (0) target = $region25
  $region24: #{bert_for_sequence_classification.15} parent=0 // pred_region
    _
  $region25: #{bert_for_sequence_classification.15} parent=0 // pred_fallthru
    _
  %p24 = scmp.eq.s32.totalorder 0, 0
  // Predicated region
  $region26: #{bert_for_sequence_classification.15} parent=0 // pred_check
    %p25 = pneg %p24
  $region27: #{bert_for_sequence_classification.15} parent=0 // pred_check_branch
    %27 = sbr.rel (%p25) target = $region29
  $region28: #{bert_for_sequence_classification.15} parent=0 // pred_region
    %vm28 = vcmask 523264
    %29 = vst.msk [vmem:[#allocation2] sm:$0xff] %vm28, 0.0
    %30 = vst.msk [vmem:[#allocation2 + $0x8] sm:$0xff] %vm28, 0.0
  $region29: #{bert_for_sequence_classification.15} parent=0 // pred_fallthru
    _
  %v31 = vld [vmem:[#allocation2] sm:$0xff]
  %v32 = vld [vmem:[#allocation2 + $0x8] sm:$0xff]
  %v33 = vld [vmem:[%s0] sm:$0xf]
  %v34 = vld [vmem:[%s0 + $0x4] sm:$0xf]
  %v35 = vld [vmem:[%s1] sm:$0xf]
  %v36 = vld [vmem:[%s1 + $0x4] sm:$0xf]
  %v37 = vld [vmem:[%s1 + $0x8] sm:$0xf]
  %v38 = vld [vmem:[%s1 + $0xc] sm:$0xf]
  %v39 = vld [vmem:[%s1 + $0x10] sm:$0xf]
  %v40 = vld [vmem:[%s1 + $0x14] sm:$0xf]
  %v41 = vld [vmem:[%s1 + $0x18] sm:$0xf]
  %v42 = vld [vmem:[%s1 + $0x1c] sm:$0xf]
  %v45 = vunpack.c.l.b16 %v33
  %v46 = vunpack.c.l.b16 %v34
  %v47 = vpack.c.b16 %v46, %v45
  %v56 = vunpack.c.l.b16 %v35
  %v57 = vunpack.c.l.b16 %v36
  %v58 = vunpack.c.l.b16 %v37
  %v59 = vunpack.c.l.b16 %v38
  %v60 = vunpack.c.l.b16 %v39
  %v61 = vunpack.c.l.b16 %v40
  %v62 = vunpack.c.l.b16 %v41
  %v63 = vunpack.c.l.b16 %v42
  %v64 = vpack.c.b16 %v57, %v56
  %v65 = vpack.c.b16 %v59, %v58
  %v66 = vpack.c.b16 %v61, %v60
  %v67 = vpack.c.b16 %v63, %v62
  %vm72 = vcmask 523264
  %v74 = vsel %vm72, %v47, 0
  %76 = vmatprep.subr.bf16.mxu0 0
  %77 = vmatpush1.bf16.msra.mxu0 %v64
  %78 = vmatprep.subr.bf16.mxu0 0
  %79 = vmatpush1.bf16.msra.mxu0 %v65
  %80 = vmatprep.subr.bf16.mxu0 0
  %81 = vmatpush1.bf16.msra.mxu0 %v66
  %82 = vmatprep.subr.bf16.mxu0 0
  %83 = vmatpush1.bf16.msra.mxu0 %v67
  %84 = vmatprep.subr.bf16.mxu0 0
  %85 = vmatpush1.bf16.msra.mxu0 0
  %86 = vmatprep.subr.bf16.mxu0 0
  %87 = vmatpush1.bf16.msra.mxu0 0
  %88 = vmatprep.subr.bf16.mxu0 0
  %89 = vmatpush1.bf16.msra.mxu0 0
  %90 = vmatprep.subr.bf16.mxu0 0
  %91 = vmatpush1.bf16.msra.mxu0 0
  %92 = vmatprep.subr.bf16.mxu0 0
  %93 = vmatpush1.bf16.msra.mxu0 0
  %94 = vmatprep.subr.bf16.mxu0 0
  %95 = vmatpush1.bf16.msra.mxu0 0
  %96 = vmatprep.subr.bf16.mxu0 0
  %97 = vmatpush1.bf16.msra.mxu0 0
  %98 = vmatprep.subr.bf16.mxu0 0
  %99 = vmatpush1.bf16.msra.mxu0 0
  %100 = vmatprep.subr.bf16.mxu0 0
  %101 = vmatpush1.bf16.msra.mxu0 0
  %102 = vmatprep.subr.bf16.mxu0 0
  %103 = vmatpush1.bf16.msra.mxu0 0
  %104 = vmatprep.subr.bf16.mxu0 0
  %105 = vmatpush1.bf16.msra.mxu0 0
  %106 = vmatprep.subr.bf16.mxu0 0
  %107 = vmatpush1.bf16.msra.mxu0 0
  %108 = vmatprep.mubr.bf16.mxu0 0
  %109 = vmatmul.mubr.bf16.gmra.mrb[0].mxu0 %v74
  %v110 = vpop.f32.mrb[0].mxu0
  %v111 = vadd.f32 0.0, %v110
  %v112 = vpop.f32.mrb[0].mxu0
  %v113 = vpop.f32.mrb[0].mxu0
  %v114 = vadd.f32 0.0, %v113
  %v115 = vpop.f32.mrb[0].mxu0
  %116 = vdwg.mxu0
  %v117 = vadd.f32 %v31, %v111
  %v118 = vadd.f32 %v32, %v114
  %119 = vst.msk [vmem:[#allocation2] sm:$0xff] %vm72, %v117
  %120 = vst.msk [vmem:[#allocation2 + $0x8] sm:$0xff] %vm72, %v118
  // Predicated region
  $region30: #{bert_for_sequence_classification.15} parent=0 // pred_check
    %p121 = pneg %p24
  $region31: #{bert_for_sequence_classification.15} parent=0 // pred_check_branch
    %123 = sbr.rel (%p121) target = $region33
  $region32: #{bert_for_sequence_classification.15} parent=0 // pred_region
    %v124 = vld [vmem:[#allocation2] sm:$0xff]
    %v125 = vld [vmem:[#allocation2 + $0x8] sm:$0xff]
    %v126 = vld [vmem:[%s2] sm:$0x1]
    %v128 = vlaneseq
    %v129 = vshrl.u32 %v128, 7
    %v130 = vsub.s32 0, %v129
    %v131 = vrot.slane %v126, %v130
    %v133 = vadd.f32 %v124, %v131
    %v134 = vadd.f32 %v125, %v131
    %v135 = vld [vmem:[%s3] sm:$0xf]
    %v136 = vld [vmem:[%s3 + $0x4] sm:$0xf]
    %v137 = vunpack.c.l.bf16 %v135
    %v138 = vunpack.c.l.bf16 %v136
    %v139 = vadd.f32 %v133, %v137
    %v140 = vadd.f32 %v134, %v138
    %v141 = vsel %vm72, %v139, 0.0
    %142 = vadd.xlane.f32.xlu0 %v141
    %v143 = vpop.xlane.xlu0 %142
    %v144 = vsel %vm72, %v140, 0.0
    %145 = vadd.xlane.f32.xlu0 %v144
    %v146 = vpop.xlane.xlu0 %145
    %v147 = vrcp.pop 64.0
    %v148 = vmul.f32 %v143, %v147
    %v149 = vmul.f32 %v146, %v147
    %v150 = vsub.f32 %v139, %v148
    %v151 = vsub.f32 %v140, %v149
    %v152 = vmul.f32 %v150, %v150
    %v153 = vmul.f32 %v151, %v151
    %v154 = vsel %vm72, %v152, 0.0
    %155 = vadd.xlane.f32.xlu0 %v154
    %v156 = vpop.xlane.xlu0 %155
    %v157 = vsel %vm72, %v153, 0.0
    %158 = vadd.xlane.f32.xlu0 %v157
    %v159 = vpop.xlane.xlu0 %158
    %v160 = vmul.f32 %v156, %v147
    %v161 = vmul.f32 %v159, %v147
    %v162 = vadd.f32 %v160, 1e-12
    %v163 = vadd.f32 %v161, 1e-12
    %v164 = vrsqrt.pop %v162
    %v165 = vrsqrt.pop %v163
    %v166 = vmul.f32 %v150, %v164
    %v167 = vmul.f32 %v151, %v165
    %v168 = vld [vmem:[%s4] sm:$0x1]
    %v170 = vlaneseq
    %v171 = vshrl.u32 %v170, 7
    %v172 = vsub.s32 0, %v171
    %v173 = vrot.slane %v168, %v172
    %v175 = vmul.f32 %v166, %v173
    %v176 = vmul.f32 %v167, %v173
    %v177 = vld [vmem:[%s5] sm:$0x1]
    %v179 = vlaneseq
    %v180 = vshrl.u32 %v179, 7
    %v181 = vsub.s32 0, %v180
    %v182 = vrot.slane %v177, %v181
    %v184 = vadd.f32 %v175, %v182
    %v185 = vadd.f32 %v176, %v182
    %v186 = vpack.c.bf16 %v185, %v184
    %v188 = vunpack.c.l.b16 %v186
    %v189 = vunpack.c.h.b16 %v186
    %v190 = vpack.c.b16 %v188, %v188
    %v191 = vpack.c.b16 %v189, %v189
    %vm194 = vcmask 519168
    %195 = vst.msk [vmem:[%s6] sm:$0xf] %vm194, %v190
    %196 = vst.msk [vmem:[%s6 + $0x4] sm:$0xf] %vm194, %v191
  $region33: #{bert_for_sequence_classification.15} parent=0 // pred_fallthru
    _
  // Predicated region
  $region34: #{bert_for_sequence_classification.15} parent=0 // pred_check
    _
  $region35: #{bert_for_sequence_classification.15} parent=0 // pred_check_branch
    %198 = sbr.rel (0) target = $region37
  $region36: #{bert_for_sequence_classification.15} parent=0 // pred_region
    _
  $region37: #{bert_for_sequence_classification.15} parent=0 // pred_fallthru
    _
  // Predicated region
  $region38: #{bert_for_sequence_classification.15} parent=0 // pred_check
    _
  $region39: #{bert_for_sequence_classification.15} parent=0 // pred_check_branch
    %200 = sbr.rel (0) target = $region41
  $region40: #{bert_for_sequence_classification.15} parent=0 // pred_region
    _
  $region41: #{bert_for_sequence_classification.15} parent=0 // pred_fallthru
    _

// kernel: bert_for_sequence_classification.16
$region0: #{bert_for_sequence_classification.16}
  #allocation0 [shape = 'u32[]', space=smem, size = 0x4, offset = 0x4, fixed_abs, tag = 'smem constant byte address 0x4 - core index']
  #allocation1 [shape = 'u32[144,128]{1,0:T(1,128)}', space=vmem, size = 0x12000, scoped, tag = 'internal scratch']
  #allocation2 [shape = 'f32[16,128]{1,0:T(8,128)}', space=vmem, size = 0x2000, scoped, tag = 'scratch operand']
  %s0 = inlined_call_operand.vmem [shape: bf16[16,64], index: 0, kind: input, shape index: {}]
  %s1 = inlined_call_operand.vmem [shape: bf16[64,128], index: 1, kind: input, shape index: {}]
  %s2 = inlined_call_operand.vmem [shape: f32[1,128], index: 2, kind: input, shape index: {}]
  %s3 = inlined_call_operand.vmem [shape: bf16[16,128], index: 3, kind: output, shape index: {}]
  %s4 = sld [smem:[#allocation0]]
  $region30: #{bert_for_sequence_classification.16} parent=0
    _
  %s6 = ssub.s32 1, %s4
  %s7 = scalar_select 0, %s6, %s4
  // Predicated region
  $region2: #{bert_for_sequence_classification.16} parent=0 // pred_check
    _
  $region3: #{bert_for_sequence_classification.16} parent=0 // pred_check_branch
    %9 = sbr.rel (0) target = $region5
  $region4: #{bert_for_sequence_classification.16} parent=0 // pred_region
    _
  $region5: #{bert_for_sequence_classification.16} parent=0 // pred_fallthru
    _
  // Predicated region
  $region6: #{bert_for_sequence_classification.16} parent=0 // pred_check
    _
  $region7: #{bert_for_sequence_classification.16} parent=0 // pred_check_branch
    %11 = sbr.rel (0) target = $region9
  $region8: #{bert_for_sequence_classification.16} parent=0 // pred_region
    _
  $region9: #{bert_for_sequence_classification.16} parent=0 // pred_fallthru
    _
  // Predicated region
  $region10: #{bert_for_sequence_classification.16} parent=0 // pred_check
    _
  $region11: #{bert_for_sequence_classification.16} parent=0 // pred_check_branch
    %13 = sbr.rel (0) target = $region13
  $region12: #{bert_for_sequence_classification.16} parent=0 // pred_region
    _
  $region13: #{bert_for_sequence_classification.16} parent=0 // pred_fallthru
    _
  %p15 = scmp.eq.s32.totalorder 0, 0
  // Predicated region
  $region14: #{bert_for_sequence_classification.16} parent=0 // pred_check
    %p16 = pneg %p15
  $region15: #{bert_for_sequence_classification.16} parent=0 // pred_check_branch
    %18 = sbr.rel (%p16) target = $region17
  $region16: #{bert_for_sequence_classification.16} parent=0 // pred_region
    %19 = vst [vmem:[#allocation2] sm:$0xff] 0.0
    %20 = vst [vmem:[#allocation2 + $0x8] sm:$0xff] 0.0
  $region17: #{bert_for_sequence_classification.16} parent=0 // pred_fallthru
    _
  %v21 = vld [vmem:[#allocation2] sm:$0xff]
  %v22 = vld [vmem:[#allocation2 + $0x8] sm:$0xff]
  %v23 = vld [vmem:[%s0] sm:$0xf]
  %v24 = vld [vmem:[%s0 + $0x4] sm:$0xf]
  %v25 = vld [vmem:[%s1] sm:$0xf]
  %v26 = vld [vmem:[%s1 + $0x4] sm:$0xf]
  %v27 = vld [vmem:[%s1 + $0x8] sm:$0xf]
  %v28 = vld [vmem:[%s1 + $0xc] sm:$0xf]
  %v29 = vld [vmem:[%s1 + $0x10] sm:$0xf]
  %v30 = vld [vmem:[%s1 + $0x14] sm:$0xf]
  %v31 = vld [vmem:[%s1 + $0x18] sm:$0xf]
  %v32 = vld [vmem:[%s1 + $0x1c] sm:$0xf]
  %v35 = vunpack.c.l.b16 %v23
  %v36 = vunpack.c.l.b16 %v24
  %v37 = vpack.c.b16 %v36, %v35
  %v46 = vunpack.c.l.b16 %v25
  %v47 = vunpack.c.l.b16 %v26
  %v48 = vunpack.c.l.b16 %v27
  %v49 = vunpack.c.l.b16 %v28
  %v50 = vunpack.c.l.b16 %v29
  %v51 = vunpack.c.l.b16 %v30
  %v52 = vunpack.c.l.b16 %v31
  %v53 = vunpack.c.l.b16 %v32
  %v54 = vpack.c.b16 %v47, %v46
  %v55 = vpack.c.b16 %v49, %v48
  %v56 = vpack.c.b16 %v51, %v50
  %v57 = vpack.c.b16 %v53, %v52
  %vm62 = vcmask 523264
  %v64 = vsel %vm62, %v37, 0
  %66 = vmatprep.subr.bf16.mxu0 0
  %67 = vmatpush1.bf16.msra.mxu0 %v54
  %68 = vmatprep.subr.bf16.mxu0 0
  %69 = vmatpush1.bf16.msra.mxu0 %v55
  %70 = vmatprep.subr.bf16.mxu0 0
  %71 = vmatpush1.bf16.msra.mxu0 %v56
  %72 = vmatprep.subr.bf16.mxu0 0
  %73 = vmatpush1.bf16.msra.mxu0 %v57
  %74 = vmatprep.subr.bf16.mxu0 0
  %75 = vmatpush1.bf16.msra.mxu0 0
  %76 = vmatprep.subr.bf16.mxu0 0
  %77 = vmatpush1.bf16.msra.mxu0 0
  %78 = vmatprep.subr.bf16.mxu0 0
  %79 = vmatpush1.bf16.msra.mxu0 0
  %80 = vmatprep.subr.bf16.mxu0 0
  %81 = vmatpush1.bf16.msra.mxu0 0
  %82 = vmatprep.subr.bf16.mxu0 0
  %83 = vmatpush1.bf16.msra.mxu0 0
  %84 = vmatprep.subr.bf16.mxu0 0
  %85 = vmatpush1.bf16.msra.mxu0 0
  %86 = vmatprep.subr.bf16.mxu0 0
  %87 = vmatpush1.bf16.msra.mxu0 0
  %88 = vmatprep.subr.bf16.mxu0 0
  %89 = vmatpush1.bf16.msra.mxu0 0
  %90 = vmatprep.subr.bf16.mxu0 0
  %91 = vmatpush1.bf16.msra.mxu0 0
  %92 = vmatprep.subr.bf16.mxu0 0
  %93 = vmatpush1.bf16.msra.mxu0 0
  %94 = vmatprep.subr.bf16.mxu0 0
  %95 = vmatpush1.bf16.msra.mxu0 0
  %96 = vmatprep.subr.bf16.mxu0 0
  %97 = vmatpush1.bf16.msra.mxu0 0
  %98 = vmatprep.mubr.bf16.mxu0 0
  %99 = vmatmul.mubr.bf16.gmra.mrb[0].mxu0 %v64
  %v100 = vpop.f32.mrb[0].mxu0
  %v101 = vadd.f32 0.0, %v100
  %v102 = vpop.f32.mrb[0].mxu0
  %v103 = vpop.f32.mrb[0].mxu0
  %v104 = vadd.f32 0.0, %v103
  %v105 = vpop.f32.mrb[0].mxu0
  %106 = vdwg.mxu0
  %v107 = vadd.f32 %v21, %v101
  %v108 = vadd.f32 %v22, %v104
  %109 = vst [vmem:[#allocation2] sm:$0xff] %v107
  %110 = vst [vmem:[#allocation2 + $0x8] sm:$0xff] %v108
  // Predicated region
  $region18: #{bert_for_sequence_classification.16} parent=0 // pred_check
    %p111 = pneg %p15
  $region19: #{bert_for_sequence_classification.16} parent=0 // pred_check_branch
    %113 = sbr.rel (%p111) target = $region21
  $region20: #{bert_for_sequence_classification.16} parent=0 // pred_region
    %v114 = vld [vmem:[#allocation2] sm:$0xff]
    %v115 = vld [vmem:[#allocation2 + $0x8] sm:$0xff]
    %v116 = vld [vmem:[%s2] sm:$0x1]
    %v118 = vlaneseq
    %v119 = vshrl.u32 %v118, 7
    %v120 = vsub.s32 0, %v119
    %v121 = vrot.slane %v116, %v120
    %v123 = vadd.f32 %v114, %v121
    %v124 = vadd.f32 %v115, %v121
    %v125 = vmul.f32 %v123, 0.5
    %v126 = vmul.f32 %v124, 0.5
    %v127 = vmul.f32 %v123, 0.044715
    %v128 = vmul.f32 %v124, 0.044715
    %v129 = vmul.f32 %v127, %v123
    %v130 = vmul.f32 %v128, %v124
    %v131 = vmul.f32 %v129, %v123
    %v132 = vmul.f32 %v130, %v124
    %v133 = vadd.f32 %v123, %v131
    %v134 = vadd.f32 %v124, %v132
    %v135 = vmul.f32 %v133, 0.7978846
    %v136 = vmul.f32 %v134, 0.7978846
    %v137 = vtanh.pop %v135
    %v138 = vtanh.pop %v136
    %v139 = vadd.f32 %v137, 1.0
    %v140 = vadd.f32 %v138, 1.0
    %v141 = vmul.f32 %v125, %v139
    %v142 = vmul.f32 %v126, %v140
    %v143 = vpack.c.bf16 %v142, %v141
    %v145 = vunpack.c.l.b16 %v143
    %v146 = vunpack.c.h.b16 %v143
    %v147 = vpack.c.b16 %v145, %v145
    %v148 = vpack.c.b16 %v146, %v146
    %151 = vst [vmem:[%s3] sm:$0xf] %v147
    %152 = vst [vmem:[%s3 + $0x4] sm:$0xf] %v148
  $region21: #{bert_for_sequence_classification.16} parent=0 // pred_fallthru
    _
  // Predicated region
  $region22: #{bert_for_sequence_classification.16} parent=0 // pred_check
    _
  $region23: #{bert_for_sequence_classification.16} parent=0 // pred_check_branch
    %154 = sbr.rel (0) target = $region25
  $region24: #{bert_for_sequence_classification.16} parent=0 // pred_region
    _
  $region25: #{bert_for_sequence_classification.16} parent=0 // pred_fallthru
    _
  // Predicated region
  $region26: #{bert_for_sequence_classification.16} parent=0 // pred_check
    _
  $region27: #{bert_for_sequence_classification.16} parent=0 // pred_check_branch
    %156 = sbr.rel (0) target = $region29
  $region28: #{bert_for_sequence_classification.16} parent=0 // pred_region
    _
  $region29: #{bert_for_sequence_classification.16} parent=0 // pred_fallthru
    _

// kernel: bert_for_sequence_classification.17
$region0: #{bert_for_sequence_classification.17}
  #allocation0 [shape = 'u32[]', space=smem, size = 0x4, offset = 0x4, fixed_abs, tag = 'smem constant byte address 0x4 - core index']
  #allocation1 [shape = 'u32[144,128]{1,0:T(1,128)}', space=vmem, size = 0x12000, scoped, tag = 'internal scratch']
  #allocation2 [shape = 'f32[16,64]{1,0:T(8,128)}', space=vmem, size = 0x2000, scoped, tag = 'scratch operand']
  %s0 = inlined_call_operand.vmem [shape: bf16[16,128], index: 0, kind: input, shape index: {}]
  %s1 = inlined_call_operand.vmem [shape: bf16[128,64], index: 1, kind: input, shape index: {}]
  %s2 = inlined_call_operand.vmem [shape: f32[1,64], index: 2, kind: input, shape index: {}]
  %s3 = inlined_call_operand.vmem [shape: bf16[16,64], index: 3, kind: input, shape index: {}]
  %s4 = inlined_call_operand.vmem [shape: f32[1,64], index: 4, kind: input, shape index: {}]
  %s5 = inlined_call_operand.vmem [shape: f32[1,64], index: 5, kind: input, shape index: {}]
  %s6 = inlined_call_operand.vmem [shape: bf16[16,64], index: 6, kind: output, shape index: {}]
  %s7 = sld [smem:[#allocation0]]
  $region42: #{bert_for_sequence_classification.17} parent=0
    _
  %s9 = ssub.s32 1, %s7
  %s10 = scalar_select 0, %s9, %s7
  // Predicated region
  $region2: #{bert_for_sequence_classification.17} parent=0 // pred_check
    _
  $region3: #{bert_for_sequence_classification.17} parent=0 // pred_check_branch
    %12 = sbr.rel (0) target = $region5
  $region4: #{bert_for_sequence_classification.17} parent=0 // pred_region
    _
  $region5: #{bert_for_sequence_classification.17} parent=0 // pred_fallthru
    _
  // Predicated region
  $region6: #{bert_for_sequence_classification.17} parent=0 // pred_check
    _
  $region7: #{bert_for_sequence_classification.17} parent=0 // pred_check_branch
    %14 = sbr.rel (0) target = $region9
  $region8: #{bert_for_sequence_classification.17} parent=0 // pred_region
    _
  $region9: #{bert_for_sequence_classification.17} parent=0 // pred_fallthru
    _
  // Predicated region
  $region10: #{bert_for_sequence_classification.17} parent=0 // pred_check
    _
  $region11: #{bert_for_sequence_classification.17} parent=0 // pred_check_branch
    %16 = sbr.rel (0) target = $region13
  $region12: #{bert_for_sequence_classification.17} parent=0 // pred_region
    _
  $region13: #{bert_for_sequence_classification.17} parent=0 // pred_fallthru
    _
  // Predicated region
  $region14: #{bert_for_sequence_classification.17} parent=0 // pred_check
    _
  $region15: #{bert_for_sequence_classification.17} parent=0 // pred_check_branch
    %18 = sbr.rel (0) target = $region17
  $region16: #{bert_for_sequence_classification.17} parent=0 // pred_region
    _
  $region17: #{bert_for_sequence_classification.17} parent=0 // pred_fallthru
    _
  // Predicated region
  $region18: #{bert_for_sequence_classification.17} parent=0 // pred_check
    _
  $region19: #{bert_for_sequence_classification.17} parent=0 // pred_check_branch
    %20 = sbr.rel (0) target = $region21
  $region20: #{bert_for_sequence_classification.17} parent=0 // pred_region
    _
  $region21: #{bert_for_sequence_classification.17} parent=0 // pred_fallthru
    _
  // Predicated region
  $region22: #{bert_for_sequence_classification.17} parent=0 // pred_check
    _
  $region23: #{bert_for_sequence_classification.17} parent=0 // pred_check_branch
    %22 = sbr.rel (0) target = $region25
  $region24: #{bert_for_sequence_classification.17} parent=0 // pred_region
    _
  $region25: #{bert_for_sequence_classification.17} parent=0 // pred_fallthru
    _
  %p24 = scmp.eq.s32.totalorder 0, 0
  // Predicated region
  $region26: #{bert_for_sequence_classification.17} parent=0 // pred_check
    %p25 = pneg %p24
  $region27: #{bert_for_sequence_classification.17} parent=0 // pred_check_branch
    %27 = sbr.rel (%p25) target = $region29
  $region28: #{bert_for_sequence_classification.17} parent=0 // pred_region
    %vm28 = vcmask 523264
    %29 = vst.msk [vmem:[#allocation2] sm:$0xff] %vm28, 0.0
    %30 = vst.msk [vmem:[#allocation2 + $0x8] sm:$0xff] %vm28, 0.0
  $region29: #{bert_for_sequence_classification.17} parent=0 // pred_fallthru
    _
  %v31 = vld [vmem:[#allocation2] sm:$0xff]
  %v32 = vld [vmem:[#allocation2 + $0x8] sm:$0xff]
  %v33 = vld [vmem:[%s0] sm:$0xf]
  %v34 = vld [vmem:[%s0 + $0x4] sm:$0xf]
  %v35 = vld [vmem:[%s1] sm:$0xf]
  %v36 = vld [vmem:[%s1 + $0x4] sm:$0xf]
  %v37 = vld [vmem:[%s1 + $0x8] sm:$0xf]
  %v38 = vld [vmem:[%s1 + $0xc] sm:$0xf]
  %v39 = vld [vmem:[%s1 + $0x10] sm:$0xf]
  %v40 = vld [vmem:[%s1 + $0x14] sm:$0xf]
  %v41 = vld [vmem:[%s1 + $0x18] sm:$0xf]
  %v42 = vld [vmem:[%s1 + $0x1c] sm:$0xf]
  %v43 = vld [vmem:[%s1 + $0x20] sm:$0xf]
  %v44 = vld [vmem:[%s1 + $0x24] sm:$0xf]
  %v45 = vld [vmem:[%s1 + $0x28] sm:$0xf]
  %v46 = vld [vmem:[%s1 + $0x2c] sm:$0xf]
  %v47 = vld [vmem:[%s1 + $0x30] sm:$0xf]
  %v48 = vld [vmem:[%s1 + $0x34] sm:$0xf]
  %v49 = vld [vmem:[%s1 + $0x38] sm:$0xf]
  %v50 = vld [vmem:[%s1 + $0x3c] sm:$0xf]
  %v53 = vunpack.c.l.b16 %v33
  %v54 = vunpack.c.l.b16 %v34
  %v55 = vpack.c.b16 %v54, %v53
  %v73 = vunpack.c.l.b16 %v35
  %v74 = vunpack.c.l.b16 %v36
  %v75 = vunpack.c.l.b16 %v37
  %v76 = vunpack.c.l.b16 %v38
  %v77 = vunpack.c.l.b16 %v39
  %v78 = vunpack.c.l.b16 %v40
  %v79 = vunpack.c.l.b16 %v41
  %v80 = vunpack.c.l.b16 %v42
  %v81 = vunpack.c.l.b16 %v43
  %v82 = vunpack.c.l.b16 %v44
  %v83 = vunpack.c.l.b16 %v45
  %v84 = vunpack.c.l.b16 %v46
  %v85 = vunpack.c.l.b16 %v47
  %v86 = vunpack.c.l.b16 %v48
  %v87 = vunpack.c.l.b16 %v49
  %v88 = vunpack.c.l.b16 %v50
  %v89 = vpack.c.b16 %v74, %v73
  %v90 = vpack.c.b16 %v76, %v75
  %v91 = vpack.c.b16 %v78, %v77
  %v92 = vpack.c.b16 %v80, %v79
  %v93 = vpack.c.b16 %v82, %v81
  %v94 = vpack.c.b16 %v84, %v83
  %v95 = vpack.c.b16 %v86, %v85
  %v96 = vpack.c.b16 %v88, %v87
  %105 = vmatprep.subr.bf16.mxu0 0
  %106 = vmatpush1.bf16.msra.mxu0 %v89
  %107 = vmatprep.subr.bf16.mxu0 0
  %108 = vmatpush1.bf16.msra.mxu0 %v90
  %109 = vmatprep.subr.bf16.mxu0 0
  %110 = vmatpush1.bf16.msra.mxu0 %v91
  %111 = vmatprep.subr.bf16.mxu0 0
  %112 = vmatpush1.bf16.msra.mxu0 %v92
  %113 = vmatprep.subr.bf16.mxu0 0
  %114 = vmatpush1.bf16.msra.mxu0 %v93
  %115 = vmatprep.subr.bf16.mxu0 0
  %116 = vmatpush1.bf16.msra.mxu0 %v94
  %117 = vmatprep.subr.bf16.mxu0 0
  %118 = vmatpush1.bf16.msra.mxu0 %v95
  %119 = vmatprep.subr.bf16.mxu0 0
  %120 = vmatpush1.bf16.msra.mxu0 %v96
  %121 = vmatprep.subr.bf16.mxu0 0
  %122 = vmatpush1.bf16.msra.mxu0 0
  %123 = vmatprep.subr.bf16.mxu0 0
  %124 = vmatpush1.bf16.msra.mxu0 0
  %125 = vmatprep.subr.bf16.mxu0 0
  %126 = vmatpush1.bf16.msra.mxu0 0
  %127 = vmatprep.subr.bf16.mxu0 0
  %128 = vmatpush1.bf16.msra.mxu0 0
  %129 = vmatprep.subr.bf16.mxu0 0
  %130 = vmatpush1.bf16.msra.mxu0 0
  %131 = vmatprep.subr.bf16.mxu0 0
  %132 = vmatpush1.bf16.msra.mxu0 0
  %133 = vmatprep.subr.bf16.mxu0 0
  %134 = vmatpush1.bf16.msra.mxu0 0
  %135 = vmatprep.subr.bf16.mxu0 0
  %136 = vmatpush1.bf16.msra.mxu0 0
  %137 = vmatprep.mubr.bf16.mxu0 0
  %138 = vmatmul.mubr.bf16.gmra.mrb[0].mxu0 %v55
  %v139 = vpop.f32.mrb[0].mxu0
  %v140 = vadd.f32 0.0, %v139
  %v141 = vpop.f32.mrb[0].mxu0
  %v142 = vpop.f32.mrb[0].mxu0
  %v143 = vadd.f32 0.0, %v142
  %v144 = vpop.f32.mrb[0].mxu0
  %145 = vdwg.mxu0
  %v146 = vadd.f32 %v31, %v140
  %v147 = vadd.f32 %v32, %v143
  %vm148 = vcmask 523264
  %149 = vst.msk [vmem:[#allocation2] sm:$0xff] %vm148, %v146
  %150 = vst.msk [vmem:[#allocation2 + $0x8] sm:$0xff] %vm148, %v147
  // Predicated region
  $region30: #{bert_for_sequence_classification.17} parent=0 // pred_check
    %p151 = pneg %p24
  $region31: #{bert_for_sequence_classification.17} parent=0 // pred_check_branch
    %153 = sbr.rel (%p151) target = $region33
  $region32: #{bert_for_sequence_classification.17} parent=0 // pred_region
    %v154 = vld [vmem:[#allocation2] sm:$0xff]
    %v155 = vld [vmem:[#allocation2 + $0x8] sm:$0xff]
    %v156 = vld [vmem:[%s2] sm:$0x1]
    %v158 = vlaneseq
    %v159 = vshrl.u32 %v158, 7
    %v160 = vsub.s32 0, %v159
    %v161 = vrot.slane %v156, %v160
    %v163 = vadd.f32 %v154, %v161
    %v164 = vadd.f32 %v155, %v161
    %v165 = vld [vmem:[%s3] sm:$0xf]
    %v166 = vld [vmem:[%s3 + $0x4] sm:$0xf]
    %v167 = vunpack.c.l.bf16 %v165
    %v168 = vunpack.c.l.bf16 %v166
    %v169 = vadd.f32 %v163, %v167
    %v170 = vadd.f32 %v164, %v168
    %v171 = vsel %vm148, %v169, 0.0
    %172 = vadd.xlane.f32.xlu0 %v171
    %v173 = vpop.xlane.xlu0 %172
    %v174 = vsel %vm148, %v170, 0.0
    %175 = vadd.xlane.f32.xlu0 %v174
    %v176 = vpop.xlane.xlu0 %175
    %v177 = vrcp.pop 64.0
    %v178 = vmul.f32 %v173, %v177
    %v179 = vmul.f32 %v176, %v177
    %v180 = vsub.f32 %v169, %v178
    %v181 = vsub.f32 %v170, %v179
    %v182 = vmul.f32 %v180, %v180
    %v183 = vmul.f32 %v181, %v181
    %v184 = vsel %vm148, %v182, 0.0
    %185 = vadd.xlane.f32.xlu0 %v184
    %v186 = vpop.xlane.xlu0 %185
    %v187 = vsel %vm148, %v183, 0.0
    %188 = vadd.xlane.f32.xlu0 %v187
    %v189 = vpop.xlane.xlu0 %188
    %v190 = vmul.f32 %v186, %v177
    %v191 = vmul.f32 %v189, %v177
    %v192 = vadd.f32 %v190, 1e-12
    %v193 = vadd.f32 %v191, 1e-12
    %v194 = vrsqrt.pop %v192
    %v195 = vrsqrt.pop %v193
    %v196 = vmul.f32 %v180, %v194
    %v197 = vmul.f32 %v181, %v195
    %v198 = vld [vmem:[%s4] sm:$0x1]
    %v200 = vlaneseq
    %v201 = vshrl.u32 %v200, 7
    %v202 = vsub.s32 0, %v201
    %v203 = vrot.slane %v198, %v202
    %v205 = vmul.f32 %v196, %v203
    %v206 = vmul.f32 %v197, %v203
    %v207 = vld [vmem:[%s5] sm:$0x1]
    %v209 = vlaneseq
    %v210 = vshrl.u32 %v209, 7
    %v211 = vsub.s32 0, %v210
    %v212 = vrot.slane %v207, %v211
    %v214 = vadd.f32 %v205, %v212
    %v215 = vadd.f32 %v206, %v212
    %v216 = vpack.c.bf16 %v215, %v214
    %v218 = vunpack.c.l.b16 %v216
    %v219 = vunpack.c.h.b16 %v216
    %v220 = vpack.c.b16 %v218, %v218
    %v221 = vpack.c.b16 %v219, %v219
    %vm224 = vcmask 519168
    %225 = vst.msk [vmem:[%s6] sm:$0xf] %vm224, %v220
    %226 = vst.msk [vmem:[%s6 + $0x4] sm:$0xf] %vm224, %v221
  $region33: #{bert_for_sequence_classification.17} parent=0 // pred_fallthru
    _
  // Predicated region
  $region34: #{bert_for_sequence_classification.17} parent=0 // pred_check
    _
  $region35: #{bert_for_sequence_classification.17} parent=0 // pred_check_branch
    %228 = sbr.rel (0) target = $region37
  $region36: #{bert_for_sequence_classification.17} parent=0 // pred_region
    _
  $region37: #{bert_for_sequence_classification.17} parent=0 // pred_fallthru
    _
  // Predicated region
  $region38: #{bert_for_sequence_classification.17} parent=0 // pred_check
    _
  $region39: #{bert_for_sequence_classification.17} parent=0 // pred_check_branch
    %230 = sbr.rel (0) target = $region41
  $region40: #{bert_for_sequence_classification.17} parent=0 // pred_region
    _
  $region41: #{bert_for_sequence_classification.17} parent=0 // pred_fallthru
    _

// kernel: bert_for_sequence_classification.23
$region0: #{bert_for_sequence_classification.23}
  #allocation0 [shape = 'u32[]', space=smem, size = 0x4, offset = 0x4, fixed_abs, tag = 'smem constant byte address 0x4 - core index']
  #allocation1 [shape = 'u32[144,128]{1,0:T(1,128)}', space=vmem, size = 0x12000, scoped, tag = 'internal scratch']
  %s0 = inlined_call_operand.vmem [shape: bf16[2,64], index: 0, kind: input, shape index: {}]
  %s1 = inlined_call_operand.vmem [shape: bf16[64,4], index: 1, kind: input, shape index: {}]
  %s2 = inlined_call_operand.vmem [shape: f32[1,4], index: 2, kind: input, shape index: {}]
  %s3 = inlined_call_operand.hbm [shape: f32[2,4], index: 3, kind: output, shape index: {}]
  %s4 = sld [smem:[#allocation0]]
  $region22: #{bert_for_sequence_classification.23} parent=0
    _
  %s6 = ssub.s32 1, %s4
  %s7 = scalar_select 0, %s6, %s4
  $region1: #{bert_for_sequence_classification.23} parent=0
    #allocation2 [shape = 'u8[1024]{0}', space=vmem, size = 0x400, scoped, tag = 'output window, operand 0, single buffered']
    #allocation3 [shape = 's32[1]{0}', space=sflag, size = 0x4, scoped, tag = 'scoped memory for bert_for_sequence_classification.23']
    %8 = vsyncpa [#allocation3], 0
    // Predicated region
    $region2: #{bert_for_sequence_classification.23} parent=1 // pred_check
      _
    $region3: #{bert_for_sequence_classification.23} parent=1 // pred_check_branch
      %10 = sbr.rel (0) target = $region5
    $region4: #{bert_for_sequence_classification.23} parent=1 // pred_region
      _
    $region5: #{bert_for_sequence_classification.23} parent=1 // pred_fallthru
      _
    // Predicated region
    $region6: #{bert_for_sequence_classification.23} parent=1 // pred_check
      _
    $region7: #{bert_for_sequence_classification.23} parent=1 // pred_check_branch
      %12 = sbr.rel (0) target = $region9
    $region8: #{bert_for_sequence_classification.23} parent=1 // pred_region
      _
    $region9: #{bert_for_sequence_classification.23} parent=1 // pred_fallthru
      _
    // Predicated region
    $region10: #{bert_for_sequence_classification.23} parent=1 // pred_check
      _
    $region11: #{bert_for_sequence_classification.23} parent=1 // pred_check_branch
      %14 = sbr.rel (0) target = $region13
    $region12: #{bert_for_sequence_classification.23} parent=1 // pred_region
      _
    $region13: #{bert_for_sequence_classification.23} parent=1 // pred_fallthru
      _
    %v16 = vld [vmem:[%s0] sm:$0x1]
    %v17 = vld [vmem:[%s1] sm:$0xf]
    %v18 = vld [vmem:[%s1 + $0x4] sm:$0xf]
    %v19 = vld [vmem:[%s1 + $0x8] sm:$0xf]
    %v20 = vld [vmem:[%s1 + $0xc] sm:$0xf]
    %v21 = vld [vmem:[%s1 + $0x10] sm:$0xf]
    %v22 = vld [vmem:[%s1 + $0x14] sm:$0xf]
    %v23 = vld [vmem:[%s1 + $0x18] sm:$0xf]
    %v24 = vld [vmem:[%s1 + $0x1c] sm:$0xf]
    %v25 = vld [vmem:[%s2] sm:$0x1]
    %v27 = vlaneseq
    %v28 = vshrl.u32 %v27, 7
    %v29 = vsub.s32 0, %v28
    %v30 = vrot.slane %v25, %v29
    %v40 = vunpack.c.l.b16 %v17
    %v41 = vunpack.c.l.b16 %v18
    %v42 = vunpack.c.l.b16 %v19
    %v43 = vunpack.c.l.b16 %v20
    %v44 = vunpack.c.l.b16 %v21
    %v45 = vunpack.c.l.b16 %v22
    %v46 = vunpack.c.l.b16 %v23
    %v47 = vunpack.c.l.b16 %v24
    %v48 = vpack.c.b16 %v41, %v40
    %v49 = vpack.c.b16 %v43, %v42
    %v50 = vpack.c.b16 %v45, %v44
    %v51 = vpack.c.b16 %v47, %v46
    %vm56 = vcmask 523264
    %v58 = vsel %vm56, %v16, 0
    %60 = vmatprep.subr.bf16.mxu0 0
    %61 = vmatpush1.bf16.msra.mxu0 %v48
    %62 = vmatprep.subr.bf16.mxu0 0
    %63 = vmatpush1.bf16.msra.mxu0 %v49
    %64 = vmatprep.subr.bf16.mxu0 0
    %65 = vmatpush1.bf16.msra.mxu0 %v50
    %66 = vmatprep.subr.bf16.mxu0 0
    %67 = vmatpush1.bf16.msra.mxu0 %v51
    %68 = vmatprep.subr.bf16.mxu0 0
    %69 = vmatpush1.bf16.msra.mxu0 0
    %70 = vmatprep.subr.bf16.mxu0 0
    %71 = vmatpush1.bf16.msra.mxu0 0
    %72 = vmatprep.subr.bf16.mxu0 0
    %73 = vmatpush1.bf16.msra.mxu0 0
    %74 = vmatprep.subr.bf16.mxu0 0
    %75 = vmatpush1.bf16.msra.mxu0 0
    %76 = vmatprep.subr.bf16.mxu0 0
    %77 = vmatpush1.bf16.msra.mxu0 0
    %78 = vmatprep.subr.bf16.mxu0 0
    %79 = vmatpush1.bf16.msra.mxu0 0
    %80 = vmatprep.subr.bf16.mxu0 0
    %81 = vmatpush1.bf16.msra.mxu0 0
    %82 = vmatprep.subr.bf16.mxu0 0
    %83 = vmatpush1.bf16.msra.mxu0 0
    %84 = vmatprep.subr.bf16.mxu0 0
    %85 = vmatpush1.bf16.msra.mxu0 0
    %86 = vmatprep.subr.bf16.mxu0 0
    %87 = vmatpush1.bf16.msra.mxu0 0
    %88 = vmatprep.subr.bf16.mxu0 0
    %89 = vmatpush1.bf16.msra.mxu0 0
    %90 = vmatprep.subr.bf16.mxu0 0
    %91 = vmatpush1.bf16.msra.mxu0 0
    %92 = vmatprep.mubr.bf16.mxu0 0
    %93 = vmatmul.mubr.bf16.gmra.mrb[0].mxu0 %v58
    %v94 = vpop.f32.mrb[0].mxu0
    %v95 = vadd.f32 %v30, %v94
    %v96 = vpop.f32.mrb[0].mxu0
    %v97 = vpop.f32.mrb[0].mxu0
    %v98 = vpop.f32.mrb[0].mxu0
    %99 = vdwg.mxu0
    %vm100 = vcmask 25600
    %v101 = vsel %vm100, %v95, -inf
    %102 = vmax.xlane.f32.xlu0 %v101
    %v103 = vpop.xlane.xlu0 %102
    %v104 = vsub.f32 %v95, %v103
    %v105 = vmul.f32 %v104, 1.442695
    %v106 = vpow.pop %v105
    %v107 = vsel %vm100, %v106, 0.0
    %108 = vadd.xlane.f32.xlu0 %v107
    %v109 = vpop.xlane.xlu0 %108
    %v110 = vlog2.pop %v109
    %v111 = vmul.f32 %v110, 0.6931472
    %v112 = vsub.f32 %v104, %v111
    %113 = vst.msk [vmem:[#allocation2] sm:$0x3] %vm100, %v112
    // Predicated region
    $region14: #{bert_for_sequence_classification.23} parent=1 // pred_check
      _
    $region15: #{bert_for_sequence_classification.23} parent=1 // pred_check_branch
      %115 = sbr.rel (0) target = $region17
    $region16: #{bert_for_sequence_classification.23} parent=1 // pred_region
      %s117 = ssub.s32 32, 32
      %118 = vsyncadd [#allocation3], %s117
      %s120 = sshll.u32 [#allocation2], 4
      %s121 = int_to_ptr.vmem [resolvable:$true] %s120
      %123 = dma.vmem_to_hbm [thread:$0]  %s121, 32, %s3, [#allocation3]
    $region17: #{bert_for_sequence_classification.23} parent=1 // pred_fallthru
      _
    // Predicated region
    $region18: #{bert_for_sequence_classification.23} parent=1 // pred_check
      _
    $region19: #{bert_for_sequence_classification.23} parent=1 // pred_check_branch
      %125 = sbr.rel (0) target = $region21
    $region20: #{bert_for_sequence_classification.23} parent=1 // pred_region
      %126 = dma.done [#allocation3], 32
    $region21: #{bert_for_sequence_classification.23} parent=1 // pred_fallthru
      _
    %127 = vsyncpa [#allocation3], 1

</llo_original>
